<compile_context>
chip_gen: v5e
topology: v5e:2x2
jax: 0.10.0
libtpu: 0.0.40
codegen_flags: <defaults>
</compile_context>

<pallas_src>
import functools

import jax
import jax.numpy as jnp
from jax import lax
from jax.experimental import pallas as pl
from jax.experimental.pallas import tpu as pltpu


def _round_up(x, m):
    return ((x + m - 1) // m) * m


def _lstm_kernel(x_ref, w_ih_ref, w_hh_ref, b_ref, w_out_ref, b_out_ref,
                 out_ref, gates_scr, h_scr, c_scr, *, seq_len):
    """Single-invocation kernel (grid=()): whole problem lives in VMEM.

    x_ref     : (T, Bp, Ip)   padded input sequence (time-major)
    w_ih_ref  : (Ip, 4*Hp)    transposed, gate-block-padded input weights
    w_hh_ref  : (Hp, 4*Hp)    transposed, gate-block-padded recurrent weights
    b_ref     : (1, 4*Hp)     combined bias (b_ih + b_hh), gate-block-padded
    w_out_ref : (Hp, Op)      transposed final linear weights
    b_out_ref : (1, Op)       final linear bias
    out_ref   : (Bp, Op)      predictions for the last timestep
    gates_scr : (T, Bp, 4*Hp) VMEM scratch with precomputed input projections
    h_scr/c_scr : (Bp, Hp)    recurrent state
    """
    T = seq_len
    Bp, Hp = h_scr.shape
    Ip = x_ref.shape[-1]

    # ---- (1) Input projection hoisted out of the recurrence:
    #          one big (T*Bp, Ip) x (Ip, 4Hp) MXU matmul for all timesteps.
    x_all = x_ref[...].reshape(T * Bp, Ip)
    proj = (jnp.dot(x_all, w_ih_ref[...], preferred_element_type=jnp.float32)
            + b_ref[...])
    gates_scr[...] = proj.reshape(T, Bp, 4 * Hp)

    # ---- (2) Sequential recurrence: only h_prev @ W_hh per step.
    h_scr[...] = jnp.zeros_like(h_scr)
    c_scr[...] = jnp.zeros_like(c_scr)
    w_hh = w_hh_ref[...]  # read once, stays in vregs/VMEM across the loop

    def step(t, carry):
        pre = gates_scr[t]                         # (Bp, 4Hp) precomputed x-part
        gates = pre + jnp.dot(h_scr[...], w_hh,
                              preferred_element_type=jnp.float32)
        # Hp is a multiple of 128 -> each gate slice is whole 128-lane groups.
        i_g = jax.nn.sigmoid(gates[:, 0 * Hp:1 * Hp])
        f_g = jax.nn.sigmoid(gates[:, 1 * Hp:2 * Hp])
        g_g = jnp.tanh(gates[:, 2 * Hp:3 * Hp])
        o_g = jax.nn.sigmoid(gates[:, 3 * Hp:4 * Hp])
        c_new = f_g * c_scr[...] + i_g * g_g
        h_new = o_g * jnp.tanh(c_new)
        c_scr[...] = c_new
        h_scr[...] = h_new
        return carry

    lax.fori_loop(0, T, step, 0, unroll=True)

    # ---- (3) Final linear on the last hidden state (lane-dense (Bp, Op) store).
    out_ref[...] = (jnp.dot(h_scr[...], w_out_ref[...],
                            preferred_element_type=jnp.float32)
                    + b_out_ref[...]).astype(out_ref.dtype)


def lstm_model_forward(input_seq, params):
    """input_seq: (B, T, I) float32 (PyTorch batch_first layout)."""
    B, T, I = input_seq.shape
    H = params["w_hh"].shape[1]          # w_hh: (4H, H)
    O = params["w_lin"].shape[0]         # w_lin: (O, H)

    # Padded sizes: batch -> sublane multiple, feature dims -> lane multiples.
    Bp = _round_up(B, 8)
    Hp = _round_up(H, 128)
    Ip = _round_up(I, 128)
    Op = _round_up(O, 128)

    f32 = jnp.float32

    # Input: (B, T, I) -> time-major (T, Bp, Ip), zero padded.
    x_tbi = jnp.transpose(input_seq.astype(f32), (1, 0, 2))
    x_p = jnp.zeros((T, Bp, Ip), f32).at[:, :B, :I].set(x_tbi)

    # Per-gate padded, transposed weights (PyTorch gate order i, f, g, o kept).
    def pad_gate_matrix(w, in_dim, in_pad):
        # w: (4H, in_dim) -> (in_pad, 4*Hp) with each gate block padded to Hp.
        w4 = w.reshape(4, H, in_dim).astype(f32)
        w4p = jnp.zeros((4, Hp, in_pad), f32).at[:, :H, :in_dim].set(w4)
        return jnp.transpose(w4p, (2, 0, 1)).reshape(in_pad, 4 * Hp)

    w_ih_p = pad_gate_matrix(params["w_ih"], I, Ip)      # (Ip, 4Hp)
    w_hh_p = pad_gate_matrix(params["w_hh"], H, Hp)      # (Hp, 4Hp)

    b4 = (params["b_ih"] + params["b_hh"]).reshape(4, H).astype(f32)
    b_p = jnp.zeros((4, Hp), f32).at[:, :H].set(b4).reshape(1, 4 * Hp)

    w_out_p = jnp.zeros((Hp, Op), f32).at[:H, :O].set(
        jnp.transpose(params["w_lin"].astype(f32), (1, 0)))
    b_out_p = jnp.zeros((1, Op), f32).at[0, :O].set(params["b_lin"].astype(f32))

    kernel = functools.partial(_lstm_kernel, seq_len=T)

    flops = (2 * T * Bp * Ip * 4 * Hp        # hoisted input projection
             + 2 * T * Bp * Hp * 4 * Hp      # recurrent matmuls
             + 2 * Bp * Hp * Op)             # final linear
    transcendentals = 5 * T * Bp * Hp        # 3 sigmoids + 2 tanh per step
    bytes_accessed = 4 * (x_p.size + w_ih_p.size + w_hh_p.size + b_p.size
                          + w_out_p.size + b_out_p.size + Bp * Op)

    vmem_spec = pl.BlockSpec(memory_space=pltpu.MemorySpace.VMEM)
    out_p = pl.pallas_call(
        kernel,
        out_shape=jax.ShapeDtypeStruct((Bp, Op), f32),
        in_specs=[vmem_spec] * 6,
        out_specs=pl.BlockSpec(memory_space=pltpu.MemorySpace.VMEM),
        scratch_shapes=[
            pltpu.VMEM((T, Bp, 4 * Hp), f32),   # precomputed input projections
            pltpu.VMEM((Bp, Hp), f32),          # h state
            pltpu.VMEM((Bp, Hp), f32),          # c state
        ],
        cost_estimate=pl.CostEstimate(
            flops=flops,
            transcendentals=transcendentals,
            bytes_accessed=bytes_accessed),
    )(x_p, w_ih_p, w_hh_p, b_p, w_out_p, b_out_p)

    return out_p[:B, :O]


def init_params(key, input_size, hidden_size, output_size):
    """Deterministic init matching PyTorch shapes (uniform(-1/sqrt(H), 1/sqrt(H)))."""
    ks = jax.random.split(key, 6)
    bound = 1.0 / jnp.sqrt(jnp.float32(hidden_size))
    u = lambda k, shape: jax.random.uniform(k, shape, jnp.float32, -bound, bound)
    return {
        "w_ih": u(ks[0], (4 * hidden_size, input_size)),
        "w_hh": u(ks[1], (4 * hidden_size, hidden_size)),
        "b_ih": u(ks[2], (4 * hidden_size,)),
        "b_hh": u(ks[3], (4 * hidden_size,)),
        "w_lin": u(ks[4], (output_size, hidden_size)),
        "b_lin": u(ks[5], (output_size,)),
    }


def _reference_forward(input_seq, params):
    """Pure-JAX reference mirroring torch.nn.LSTM + Linear semantics."""
    B, T, I = input_seq.shape
    H = params["w_hh"].shape[1]
    h = jnp.zeros((B, H), jnp.float32)
    c = jnp.zeros((B, H), jnp.float32)
    w_ih_t = params["w_ih"].T
    w_hh_t = params["w_hh"].T
    b = params["b_ih"] + params["b_hh"]
    for t in range(T):
        g = input_seq[:, t, :] @ w_ih_t + h @ w_hh_t + b
        i_g = jax.nn.sigmoid(g[:, 0 * H:1 * H])
        f_g = jax.nn.sigmoid(g[:, 1 * H:2 * H])
        g_g = jnp.tanh(g[:, 2 * H:3 * H])
        o_g = jax.nn.sigmoid(g[:, 3 * H:4 * H])
        c = f_g * c + i_g * g_g
        h = o_g * jnp.tanh(c)
    return h @ params["w_lin"].T + params["b_lin"]


if __name__ == "__main__":
    B, T, INPUT, HIDDEN, OUTPUT = 2, 8, 4, 32, 4

    key = jax.random.PRNGKey(0)
    k_x, k_p = jax.random.split(key)
    x = jax.random.normal(k_x, (B, T, INPUT), jnp.float32)
    params = init_params(k_p, INPUT, HIDDEN, OUTPUT)

    out = lstm_model_forward(x, params)
    out = jax.block_until_ready(out)

    ref = _reference_forward(x, params)
    assert out.shape == (B, OUTPUT)
    assert jnp.allclose(out, ref, atol=1e-4, rtol=1e-4), (out, ref)

    print("KERNEL_OK")
</pallas_src>

<mosaic_0001>
module attributes {stable_mosaic.version = 11 : i64} {
  func.func @_lstm_kernel(%arg0: memref<8x8x128xf32, #tpu.memory_space<vmem>>, %arg1: memref<128x512xf32, #tpu.memory_space<vmem>>, %arg2: memref<128x512xf32, #tpu.memory_space<vmem>>, %arg3: memref<1x512xf32, #tpu.memory_space<vmem>>, %arg4: memref<128x128xf32, #tpu.memory_space<vmem>>, %arg5: memref<1x128xf32, #tpu.memory_space<vmem>>, %arg6: memref<8x128xf32, #tpu.memory_space<vmem>>, %arg7: memref<8x8x512xf32, #tpu.memory_space<vmem>>, %arg8: memref<8x128xf32, #tpu.memory_space<vmem>>, %arg9: memref<8x128xf32, #tpu.memory_space<vmem>>) attributes {dimension_semantics = [], scalar_prefetch = 0 : i64, scratch_operands = 3 : i64, tpu.core_type = #tpu.core_type<tc>} {
    %c0 = arith.constant 0 : index
    %c0_0 = arith.constant 0 : index
    %c0_1 = arith.constant 0 : index
    %0 = vector.load %arg0[%c0, %c0_0, %c0_1] : memref<8x8x128xf32, #tpu.memory_space<vmem>>, vector<8x8x128xf32>
    %1 = vector.shape_cast %0 : vector<8x8x128xf32> to vector<64x128xf32>
    %c0_2 = arith.constant 0 : index
    %c0_3 = arith.constant 0 : index
    %2 = vector.load %arg1[%c0_2, %c0_3] : memref<128x512xf32, #tpu.memory_space<vmem>>, vector<128x512xf32>
    %cst = arith.constant dense<0.000000e+00> : vector<64x512xf32>
    %3 = tpu.matmul %1, %2, %cst {dimension_numbers = #tpu.dot_dimension_numbers<[1], [0], [0], [1], [0, 0, 1, 1], [], []>} : vector<64x128xf32>, vector<128x512xf32>, vector<64x512xf32> -> vector<64x512xf32>
    %c0_4 = arith.constant 0 : index
    %c0_5 = arith.constant 0 : index
    %4 = vector.load %arg3[%c0_4, %c0_5] : memref<1x512xf32, #tpu.memory_space<vmem>>, vector<1x512xf32>
    %5 = vector.broadcast %4 : vector<1x512xf32> to vector<64x512xf32>
    %6 = arith.addf %3, %5 : vector<64x512xf32>
    %7 = vector.shape_cast %6 : vector<64x512xf32> to vector<8x8x512xf32>
    %c0_6 = arith.constant 0 : index
    %c0_7 = arith.constant 0 : index
    %c0_8 = arith.constant 0 : index
    %8 = vector.load %arg7[%c0_6, %c0_7, %c0_8] : memref<8x8x512xf32, #tpu.memory_space<vmem>>, vector<8x8x512xf32>
    tpu.vector_store %arg7[%c0_6, %c0_7, %c0_8], %7 {strides = array<i32>} : memref<8x8x512xf32, #tpu.memory_space<vmem>>, vector<8x8x512xf32>,
    %cst_9 = arith.constant 0.000000e+00 : f32
    %9 = vector.broadcast %cst_9 : f32 to vector<8x128xf32>
    %c0_10 = arith.constant 0 : index
    %c0_11 = arith.constant 0 : index
    %10 = vector.load %arg8[%c0_10, %c0_11] : memref<8x128xf32, #tpu.memory_space<vmem>>, vector<8x128xf32>
    tpu.vector_store %arg8[%c0_10, %c0_11], %9 {strides = array<i32>} : memref<8x128xf32, #tpu.memory_space<vmem>>, vector<8x128xf32>,
    %cst_12 = arith.constant 0.000000e+00 : f32
    %11 = vector.broadcast %cst_12 : f32 to vector<8x128xf32>
    %c0_13 = arith.constant 0 : index
    %c0_14 = arith.constant 0 : index
    %12 = vector.load %arg9[%c0_13, %c0_14] : memref<8x128xf32, #tpu.memory_space<vmem>>, vector<8x128xf32>
    tpu.vector_store %arg9[%c0_13, %c0_14], %11 {strides = array<i32>} : memref<8x128xf32, #tpu.memory_space<vmem>>, vector<8x128xf32>,
    %c0_15 = arith.constant 0 : index
    %c0_16 = arith.constant 0 : index
    %13 = vector.load %arg2[%c0_15, %c0_16] : memref<128x512xf32, #tpu.memory_space<vmem>>, vector<128x512xf32>
    %c0_i32 = arith.constant 0 : i32
    %14 = arith.index_cast %c0_i32 : i32 to index
    %c0_17 = arith.constant 0 : index
    %c0_18 = arith.constant 0 : index
    %15 = vector.load %arg7[%14, %c0_17, %c0_18] : memref<8x8x512xf32, #tpu.memory_space<vmem>>, vector<1x8x512xf32>
    %16 = vector.shape_cast %15 : vector<1x8x512xf32> to vector<8x512xf32>
    %c0_19 = arith.constant 0 : index
    %c0_20 = arith.constant 0 : index
    %17 = vector.load %arg8[%c0_19, %c0_20] : memref<8x128xf32, #tpu.memory_space<vmem>>, vector<8x128xf32>
    %cst_21 = arith.constant dense<0.000000e+00> : vector<8x512xf32>
    %18 = tpu.matmul %17, %13, %cst_21 {dimension_numbers = #tpu.dot_dimension_numbers<[1], [0], [0], [1], [0, 0, 1, 1], [], []>} : vector<8x128xf32>, vector<128x512xf32>, vector<8x512xf32> -> vector<8x512xf32>
    %19 = arith.addf %16, %18 : vector<8x512xf32>
    %20 = vector.extract_strided_slice %19 {offsets = [0, 0], sizes = [8, 128], strides = [1, 1]} : vector<8x512xf32> to vector<8x128xf32>
    %21 = arith.negf %20 : vector<8x128xf32>
    %22 = math.exp %21 : vector<8x128xf32>
    %cst_22 = arith.constant 1.000000e+00 : f32
    %23 = vector.broadcast %cst_22 : f32 to vector<8x128xf32>
    %24 = arith.addf %23, %22 : vector<8x128xf32>
    %25 = arith.divf %23, %24 : vector<8x128xf32>
    %26 = vector.extract_strided_slice %19 {offsets = [0, 128], sizes = [8, 128], strides = [1, 1]} : vector<8x512xf32> to vector<8x128xf32>
    %27 = arith.negf %26 : vector<8x128xf32>
    %28 = math.exp %27 : vector<8x128xf32>
    %cst_23 = arith.constant 1.000000e+00 : f32
    %29 = vector.broadcast %cst_23 : f32 to vector<8x128xf32>
    %30 = arith.addf %29, %28 : vector<8x128xf32>
    %31 = arith.divf %29, %30 : vector<8x128xf32>
    %32 = vector.extract_strided_slice %19 {offsets = [0, 256], sizes = [8, 128], strides = [1, 1]} : vector<8x512xf32> to vector<8x128xf32>
    %33 = math.tanh %32 : vector<8x128xf32>
    %34 = vector.extract_strided_slice %19 {offsets = [0, 384], sizes = [8, 128], strides = [1, 1]} : vector<8x512xf32> to vector<8x128xf32>
    %35 = arith.negf %34 : vector<8x128xf32>
    %36 = math.exp %35 : vector<8x128xf32>
    %cst_24 = arith.constant 1.000000e+00 : f32
    %37 = vector.broadcast %cst_24 : f32 to vector<8x128xf32>
    %38 = arith.addf %37, %36 : vector<8x128xf32>
    %39 = arith.divf %37, %38 : vector<8x128xf32>
    %c0_25 = arith.constant 0 : index
    %c0_26 = arith.constant 0 : index
    %40 = vector.load %arg9[%c0_25, %c0_26] : memref<8x128xf32, #tpu.memory_space<vmem>>, vector<8x128xf32>
    %41 = arith.mulf %31, %40 : vector<8x128xf32>
    %42 = arith.mulf %25, %33 : vector<8x128xf32>
    %43 = arith.addf %41, %42 : vector<8x128xf32>
    %44 = math.tanh %43 : vector<8x128xf32>
    %45 = arith.mulf %39, %44 : vector<8x128xf32>
    %c0_27 = arith.constant 0 : index
    %c0_28 = arith.constant 0 : index
    %46 = vector.load %arg9[%c0_27, %c0_28] : memref<8x128xf32, #tpu.memory_space<vmem>>, vector<8x128xf32>
    tpu.vector_store %arg9[%c0_27, %c0_28], %43 {strides = array<i32>} : memref<8x128xf32, #tpu.memory_space<vmem>>, vector<8x128xf32>,
    %c0_29 = arith.constant 0 : index
    %c0_30 = arith.constant 0 : index
    %47 = vector.load %arg8[%c0_29, %c0_30] : memref<8x128xf32, #tpu.memory_space<vmem>>, vector<8x128xf32>
    tpu.vector_store %arg8[%c0_29, %c0_30], %45 {strides = array<i32>} : memref<8x128xf32, #tpu.memory_space<vmem>>, vector<8x128xf32>,
    %c1_i32 = arith.constant 1 : i32
    %48 = arith.index_cast %c1_i32 : i32 to index
    %c0_31 = arith.constant 0 : index
    %c0_32 = arith.constant 0 : index
    %49 = vector.load %arg7[%48, %c0_31, %c0_32] : memref<8x8x512xf32, #tpu.memory_space<vmem>>, vector<1x8x512xf32>
    %50 = vector.shape_cast %49 : vector<1x8x512xf32> to vector<8x512xf32>
    %c0_33 = arith.constant 0 : index
    %c0_34 = arith.constant 0 : index
    %51 = vector.load %arg8[%c0_33, %c0_34] : memref<8x128xf32, #tpu.memory_space<vmem>>, vector<8x128xf32>
    %cst_35 = arith.constant dense<0.000000e+00> : vector<8x512xf32>
    %52 = tpu.matmul %51, %13, %cst_35 {dimension_numbers = #tpu.dot_dimension_numbers<[1], [0], [0], [1], [0, 0, 1, 1], [], []>} : vector<8x128xf32>, vector<128x512xf32>, vector<8x512xf32> -> vector<8x512xf32>
    %53 = arith.addf %50, %52 : vector<8x512xf32>
    %54 = vector.extract_strided_slice %53 {offsets = [0, 0], sizes = [8, 128], strides = [1, 1]} : vector<8x512xf32> to vector<8x128xf32>
    %55 = arith.negf %54 : vector<8x128xf32>
    %56 = math.exp %55 : vector<8x128xf32>
    %cst_36 = arith.constant 1.000000e+00 : f32
    %57 = vector.broadcast %cst_36 : f32 to vector<8x128xf32>
    %58 = arith.addf %57, %56 : vector<8x128xf32>
    %59 = arith.divf %57, %58 : vector<8x128xf32>
    %60 = vector.extract_strided_slice %53 {offsets = [0, 128], sizes = [8, 128], strides = [1, 1]} : vector<8x512xf32> to vector<8x128xf32>
    %61 = arith.negf %60 : vector<8x128xf32>
    %62 = math.exp %61 : vector<8x128xf32>
    %cst_37 = arith.constant 1.000000e+00 : f32
    %63 = vector.broadcast %cst_37 : f32 to vector<8x128xf32>
    %64 = arith.addf %63, %62 : vector<8x128xf32>
    %65 = arith.divf %63, %64 : vector<8x128xf32>
    %66 = vector.extract_strided_slice %53 {offsets = [0, 256], sizes = [8, 128], strides = [1, 1]} : vector<8x512xf32> to vector<8x128xf32>
    %67 = math.tanh %66 : vector<8x128xf32>
    %68 = vector.extract_strided_slice %53 {offsets = [0, 384], sizes = [8, 128], strides = [1, 1]} : vector<8x512xf32> to vector<8x128xf32>
    %69 = arith.negf %68 : vector<8x128xf32>
    %70 = math.exp %69 : vector<8x128xf32>
    %cst_38 = arith.constant 1.000000e+00 : f32
    %71 = vector.broadcast %cst_38 : f32 to vector<8x128xf32>
    %72 = arith.addf %71, %70 : vector<8x128xf32>
    %73 = arith.divf %71, %72 : vector<8x128xf32>
    %c0_39 = arith.constant 0 : index
    %c0_40 = arith.constant 0 : index
    %74 = vector.load %arg9[%c0_39, %c0_40] : memref<8x128xf32, #tpu.memory_space<vmem>>, vector<8x128xf32>
    %75 = arith.mulf %65, %74 : vector<8x128xf32>
    %76 = arith.mulf %59, %67 : vector<8x128xf32>
    %77 = arith.addf %75, %76 : vector<8x128xf32>
    %78 = math.tanh %77 : vector<8x128xf32>
    %79 = arith.mulf %73, %78 : vector<8x128xf32>
    %c0_41 = arith.constant 0 : index
    %c0_42 = arith.constant 0 : index
    %80 = vector.load %arg9[%c0_41, %c0_42] : memref<8x128xf32, #tpu.memory_space<vmem>>, vector<8x128xf32>
    tpu.vector_store %arg9[%c0_41, %c0_42], %77 {strides = array<i32>} : memref<8x128xf32, #tpu.memory_space<vmem>>, vector<8x128xf32>,
    %c0_43 = arith.constant 0 : index
    %c0_44 = arith.constant 0 : index
    %81 = vector.load %arg8[%c0_43, %c0_44] : memref<8x128xf32, #tpu.memory_space<vmem>>, vector<8x128xf32>
    tpu.vector_store %arg8[%c0_43, %c0_44], %79 {strides = array<i32>} : memref<8x128xf32, #tpu.memory_space<vmem>>, vector<8x128xf32>,
    %c2_i32 = arith.constant 2 : i32
    %82 = arith.index_cast %c2_i32 : i32 to index
    %c0_45 = arith.constant 0 : index
    %c0_46 = arith.constant 0 : index
    %83 = vector.load %arg7[%82, %c0_45, %c0_46] : memref<8x8x512xf32, #tpu.memory_space<vmem>>, vector<1x8x512xf32>
    %84 = vector.shape_cast %83 : vector<1x8x512xf32> to vector<8x512xf32>
    %c0_47 = arith.constant 0 : index
    %c0_48 = arith.constant 0 : index
    %85 = vector.load %arg8[%c0_47, %c0_48] : memref<8x128xf32, #tpu.memory_space<vmem>>, vector<8x128xf32>
    %cst_49 = arith.constant dense<0.000000e+00> : vector<8x512xf32>
    %86 = tpu.matmul %85, %13, %cst_49 {dimension_numbers = #tpu.dot_dimension_numbers<[1], [0], [0], [1], [0, 0, 1, 1], [], []>} : vector<8x128xf32>, vector<128x512xf32>, vector<8x512xf32> -> vector<8x512xf32>
    %87 = arith.addf %84, %86 : vector<8x512xf32>
    %88 = vector.extract_strided_slice %87 {offsets = [0, 0], sizes = [8, 128], strides = [1, 1]} : vector<8x512xf32> to vector<8x128xf32>
    %89 = arith.negf %88 : vector<8x128xf32>
    %90 = math.exp %89 : vector<8x128xf32>
    %cst_50 = arith.constant 1.000000e+00 : f32
    %91 = vector.broadcast %cst_50 : f32 to vector<8x128xf32>
    %92 = arith.addf %91, %90 : vector<8x128xf32>
    %93 = arith.divf %91, %92 : vector<8x128xf32>
    %94 = vector.extract_strided_slice %87 {offsets = [0, 128], sizes = [8, 128], strides = [1, 1]} : vector<8x512xf32> to vector<8x128xf32>
    %95 = arith.negf %94 : vector<8x128xf32>
    %96 = math.exp %95 : vector<8x128xf32>
    %cst_51 = arith.constant 1.000000e+00 : f32
    %97 = vector.broadcast %cst_51 : f32 to vector<8x128xf32>
    %98 = arith.addf %97, %96 : vector<8x128xf32>
    %99 = arith.divf %97, %98 : vector<8x128xf32>
    %100 = vector.extract_strided_slice %87 {offsets = [0, 256], sizes = [8, 128], strides = [1, 1]} : vector<8x512xf32> to vector<8x128xf32>
    %101 = math.tanh %100 : vector<8x128xf32>
    %102 = vector.extract_strided_slice %87 {offsets = [0, 384], sizes = [8, 128], strides = [1, 1]} : vector<8x512xf32> to vector<8x128xf32>
    %103 = arith.negf %102 : vector<8x128xf32>
    %104 = math.exp %103 : vector<8x128xf32>
    %cst_52 = arith.constant 1.000000e+00 : f32
    %105 = vector.broadcast %cst_52 : f32 to vector<8x128xf32>
    %106 = arith.addf %105, %104 : vector<8x128xf32>
    %107 = arith.divf %105, %106 : vector<8x128xf32>
    %c0_53 = arith.constant 0 : index
    %c0_54 = arith.constant 0 : index
    %108 = vector.load %arg9[%c0_53, %c0_54] : memref<8x128xf32, #tpu.memory_space<vmem>>, vector<8x128xf32>
    %109 = arith.mulf %99, %108 : vector<8x128xf32>
    %110 = arith.mulf %93, %101 : vector<8x128xf32>
    %111 = arith.addf %109, %110 : vector<8x128xf32>
    %112 = math.tanh %111 : vector<8x128xf32>
    %113 = arith.mulf %107, %112 : vector<8x128xf32>
    %c0_55 = arith.constant 0 : index
    %c0_56 = arith.constant 0 : index
    %114 = vector.load %arg9[%c0_55, %c0_56] : memref<8x128xf32, #tpu.memory_space<vmem>>, vector<8x128xf32>
    tpu.vector_store %arg9[%c0_55, %c0_56], %111 {strides = array<i32>} : memref<8x128xf32, #tpu.memory_space<vmem>>, vector<8x128xf32>,
    %c0_57 = arith.constant 0 : index
    %c0_58 = arith.constant 0 : index
    %115 = vector.load %arg8[%c0_57, %c0_58] : memref<8x128xf32, #tpu.memory_space<vmem>>, vector<8x128xf32>
    tpu.vector_store %arg8[%c0_57, %c0_58], %113 {strides = array<i32>} : memref<8x128xf32, #tpu.memory_space<vmem>>, vector<8x128xf32>,
    %c3_i32 = arith.constant 3 : i32
    %116 = arith.index_cast %c3_i32 : i32 to index
    %c0_59 = arith.constant 0 : index
    %c0_60 = arith.constant 0 : index
    %117 = vector.load %arg7[%116, %c0_59, %c0_60] : memref<8x8x512xf32, #tpu.memory_space<vmem>>, vector<1x8x512xf32>
    %118 = vector.shape_cast %117 : vector<1x8x512xf32> to vector<8x512xf32>
    %c0_61 = arith.constant 0 : index
    %c0_62 = arith.constant 0 : index
    %119 = vector.load %arg8[%c0_61, %c0_62] : memref<8x128xf32, #tpu.memory_space<vmem>>, vector<8x128xf32>
    %cst_63 = arith.constant dense<0.000000e+00> : vector<8x512xf32>
    %120 = tpu.matmul %119, %13, %cst_63 {dimension_numbers = #tpu.dot_dimension_numbers<[1], [0], [0], [1], [0, 0, 1, 1], [], []>} : vector<8x128xf32>, vector<128x512xf32>, vector<8x512xf32> -> vector<8x512xf32>
    %121 = arith.addf %118, %120 : vector<8x512xf32>
    %122 = vector.extract_strided_slice %121 {offsets = [0, 0], sizes = [8, 128], strides = [1, 1]} : vector<8x512xf32> to vector<8x128xf32>
    %123 = arith.negf %122 : vector<8x128xf32>
    %124 = math.exp %123 : vector<8x128xf32>
    %cst_64 = arith.constant 1.000000e+00 : f32
    %125 = vector.broadcast %cst_64 : f32 to vector<8x128xf32>
    %126 = arith.addf %125, %124 : vector<8x128xf32>
    %127 = arith.divf %125, %126 : vector<8x128xf32>
    %128 = vector.extract_strided_slice %121 {offsets = [0, 128], sizes = [8, 128], strides = [1, 1]} : vector<8x512xf32> to vector<8x128xf32>
    %129 = arith.negf %128 : vector<8x128xf32>
    %130 = math.exp %129 : vector<8x128xf32>
    %cst_65 = arith.constant 1.000000e+00 : f32
    %131 = vector.broadcast %cst_65 : f32 to vector<8x128xf32>
    %132 = arith.addf %131, %130 : vector<8x128xf32>
    %133 = arith.divf %131, %132 : vector<8x128xf32>
    %134 = vector.extract_strided_slice %121 {offsets = [0, 256], sizes = [8, 128], strides = [1, 1]} : vector<8x512xf32> to vector<8x128xf32>
    %135 = math.tanh %134 : vector<8x128xf32>
    %136 = vector.extract_strided_slice %121 {offsets = [0, 384], sizes = [8, 128], strides = [1, 1]} : vector<8x512xf32> to vector<8x128xf32>
    %137 = arith.negf %136 : vector<8x128xf32>
    %138 = math.exp %137 : vector<8x128xf32>
    %cst_66 = arith.constant 1.000000e+00 : f32
    %139 = vector.broadcast %cst_66 : f32 to vector<8x128xf32>
    %140 = arith.addf %139, %138 : vector<8x128xf32>
    %141 = arith.divf %139, %140 : vector<8x128xf32>
    %c0_67 = arith.constant 0 : index
    %c0_68 = arith.constant 0 : index
    %142 = vector.load %arg9[%c0_67, %c0_68] : memref<8x128xf32, #tpu.memory_space<vmem>>, vector<8x128xf32>
    %143 = arith.mulf %133, %142 : vector<8x128xf32>
    %144 = arith.mulf %127, %135 : vector<8x128xf32>
    %145 = arith.addf %143, %144 : vector<8x128xf32>
    %146 = math.tanh %145 : vector<8x128xf32>
    %147 = arith.mulf %141, %146 : vector<8x128xf32>
    %c0_69 = arith.constant 0 : index
    %c0_70 = arith.constant 0 : index
    %148 = vector.load %arg9[%c0_69, %c0_70] : memref<8x128xf32, #tpu.memory_space<vmem>>, vector<8x128xf32>
    tpu.vector_store %arg9[%c0_69, %c0_70], %145 {strides = array<i32>} : memref<8x128xf32, #tpu.memory_space<vmem>>, vector<8x128xf32>,
    %c0_71 = arith.constant 0 : index
    %c0_72 = arith.constant 0 : index
    %149 = vector.load %arg8[%c0_71, %c0_72] : memref<8x128xf32, #tpu.memory_space<vmem>>, vector<8x128xf32>
    tpu.vector_store %arg8[%c0_71, %c0_72], %147 {strides = array<i32>} : memref<8x128xf32, #tpu.memory_space<vmem>>, vector<8x128xf32>,
    %c4_i32 = arith.constant 4 : i32
    %150 = arith.index_cast %c4_i32 : i32 to index
    %c0_73 = arith.constant 0 : index
    %c0_74 = arith.constant 0 : index
    %151 = vector.load %arg7[%150, %c0_73, %c0_74] : memref<8x8x512xf32, #tpu.memory_space<vmem>>, vector<1x8x512xf32>
    %152 = vector.shape_cast %151 : vector<1x8x512xf32> to vector<8x512xf32>
    %c0_75 = arith.constant 0 : index
    %c0_76 = arith.constant 0 : index
    %153 = vector.load %arg8[%c0_75, %c0_76] : memref<8x128xf32, #tpu.memory_space<vmem>>, vector<8x128xf32>
    %cst_77 = arith.constant dense<0.000000e+00> : vector<8x512xf32>
    %154 = tpu.matmul %153, %13, %cst_77 {dimension_numbers = #tpu.dot_dimension_numbers<[1], [0], [0], [1], [0, 0, 1, 1], [], []>} : vector<8x128xf32>, vector<128x512xf32>, vector<8x512xf32> -> vector<8x512xf32>
    %155 = arith.addf %152, %154 : vector<8x512xf32>
    %156 = vector.extract_strided_slice %155 {offsets = [0, 0], sizes = [8, 128], strides = [1, 1]} : vector<8x512xf32> to vector<8x128xf32>
    %157 = arith.negf %156 : vector<8x128xf32>
    %158 = math.exp %157 : vector<8x128xf32>
    %cst_78 = arith.constant 1.000000e+00 : f32
    %159 = vector.broadcast %cst_78 : f32 to vector<8x128xf32>
    %160 = arith.addf %159, %158 : vector<8x128xf32>
    %161 = arith.divf %159, %160 : vector<8x128xf32>
    %162 = vector.extract_strided_slice %155 {offsets = [0, 128], sizes = [8, 128], strides = [1, 1]} : vector<8x512xf32> to vector<8x128xf32>
    %163 = arith.negf %162 : vector<8x128xf32>
    %164 = math.exp %163 : vector<8x128xf32>
    %cst_79 = arith.constant 1.000000e+00 : f32
    %165 = vector.broadcast %cst_79 : f32 to vector<8x128xf32>
    %166 = arith.addf %165, %164 : vector<8x128xf32>
    %167 = arith.divf %165, %166 : vector<8x128xf32>
    %168 = vector.extract_strided_slice %155 {offsets = [0, 256], sizes = [8, 128], strides = [1, 1]} : vector<8x512xf32> to vector<8x128xf32>
    %169 = math.tanh %168 : vector<8x128xf32>
    %170 = vector.extract_strided_slice %155 {offsets = [0, 384], sizes = [8, 128], strides = [1, 1]} : vector<8x512xf32> to vector<8x128xf32>
    %171 = arith.negf %170 : vector<8x128xf32>
    %172 = math.exp %171 : vector<8x128xf32>
    %cst_80 = arith.constant 1.000000e+00 : f32
    %173 = vector.broadcast %cst_80 : f32 to vector<8x128xf32>
    %174 = arith.addf %173, %172 : vector<8x128xf32>
    %175 = arith.divf %173, %174 : vector<8x128xf32>
    %c0_81 = arith.constant 0 : index
    %c0_82 = arith.constant 0 : index
    %176 = vector.load %arg9[%c0_81, %c0_82] : memref<8x128xf32, #tpu.memory_space<vmem>>, vector<8x128xf32>
    %177 = arith.mulf %167, %176 : vector<8x128xf32>
    %178 = arith.mulf %161, %169 : vector<8x128xf32>
    %179 = arith.addf %177, %178 : vector<8x128xf32>
    %180 = math.tanh %179 : vector<8x128xf32>
    %181 = arith.mulf %175, %180 : vector<8x128xf32>
    %c0_83 = arith.constant 0 : index
    %c0_84 = arith.constant 0 : index
    %182 = vector.load %arg9[%c0_83, %c0_84] : memref<8x128xf32, #tpu.memory_space<vmem>>, vector<8x128xf32>
    tpu.vector_store %arg9[%c0_83, %c0_84], %179 {strides = array<i32>} : memref<8x128xf32, #tpu.memory_space<vmem>>, vector<8x128xf32>,
    %c0_85 = arith.constant 0 : index
    %c0_86 = arith.constant 0 : index
    %183 = vector.load %arg8[%c0_85, %c0_86] : memref<8x128xf32, #tpu.memory_space<vmem>>, vector<8x128xf32>
    tpu.vector_store %arg8[%c0_85, %c0_86], %181 {strides = array<i32>} : memref<8x128xf32, #tpu.memory_space<vmem>>, vector<8x128xf32>,
    %c5_i32 = arith.constant 5 : i32
    %184 = arith.index_cast %c5_i32 : i32 to index
    %c0_87 = arith.constant 0 : index
    %c0_88 = arith.constant 0 : index
    %185 = vector.load %arg7[%184, %c0_87, %c0_88] : memref<8x8x512xf32, #tpu.memory_space<vmem>>, vector<1x8x512xf32>
    %186 = vector.shape_cast %185 : vector<1x8x512xf32> to vector<8x512xf32>
    %c0_89 = arith.constant 0 : index
    %c0_90 = arith.constant 0 : index
    %187 = vector.load %arg8[%c0_89, %c0_90] : memref<8x128xf32, #tpu.memory_space<vmem>>, vector<8x128xf32>
    %cst_91 = arith.constant dense<0.000000e+00> : vector<8x512xf32>
    %188 = tpu.matmul %187, %13, %cst_91 {dimension_numbers = #tpu.dot_dimension_numbers<[1], [0], [0], [1], [0, 0, 1, 1], [], []>} : vector<8x128xf32>, vector<128x512xf32>, vector<8x512xf32> -> vector<8x512xf32>
    %189 = arith.addf %186, %188 : vector<8x512xf32>
    %190 = vector.extract_strided_slice %189 {offsets = [0, 0], sizes = [8, 128], strides = [1, 1]} : vector<8x512xf32> to vector<8x128xf32>
    %191 = arith.negf %190 : vector<8x128xf32>
    %192 = math.exp %191 : vector<8x128xf32>
    %cst_92 = arith.constant 1.000000e+00 : f32
    %193 = vector.broadcast %cst_92 : f32 to vector<8x128xf32>
    %194 = arith.addf %193, %192 : vector<8x128xf32>
    %195 = arith.divf %193, %194 : vector<8x128xf32>
    %196 = vector.extract_strided_slice %189 {offsets = [0, 128], sizes = [8, 128], strides = [1, 1]} : vector<8x512xf32> to vector<8x128xf32>
    %197 = arith.negf %196 : vector<8x128xf32>
    %198 = math.exp %197 : vector<8x128xf32>
    %cst_93 = arith.constant 1.000000e+00 : f32
    %199 = vector.broadcast %cst_93 : f32 to vector<8x128xf32>
    %200 = arith.addf %199, %198 : vector<8x128xf32>
    %201 = arith.divf %199, %200 : vector<8x128xf32>
    %202 = vector.extract_strided_slice %189 {offsets = [0, 256], sizes = [8, 128], strides = [1, 1]} : vector<8x512xf32> to vector<8x128xf32>
    %203 = math.tanh %202 : vector<8x128xf32>
    %204 = vector.extract_strided_slice %189 {offsets = [0, 384], sizes = [8, 128], strides = [1, 1]} : vector<8x512xf32> to vector<8x128xf32>
    %205 = arith.negf %204 : vector<8x128xf32>
    %206 = math.exp %205 : vector<8x128xf32>
    %cst_94 = arith.constant 1.000000e+00 : f32
    %207 = vector.broadcast %cst_94 : f32 to vector<8x128xf32>
    %208 = arith.addf %207, %206 : vector<8x128xf32>
    %209 = arith.divf %207, %208 : vector<8x128xf32>
    %c0_95 = arith.constant 0 : index
    %c0_96 = arith.constant 0 : index
    %210 = vector.load %arg9[%c0_95, %c0_96] : memref<8x128xf32, #tpu.memory_space<vmem>>, vector<8x128xf32>
    %211 = arith.mulf %201, %210 : vector<8x128xf32>
    %212 = arith.mulf %195, %203 : vector<8x128xf32>
    %213 = arith.addf %211, %212 : vector<8x128xf32>
    %214 = math.tanh %213 : vector<8x128xf32>
    %215 = arith.mulf %209, %214 : vector<8x128xf32>
    %c0_97 = arith.constant 0 : index
    %c0_98 = arith.constant 0 : index
    %216 = vector.load %arg9[%c0_97, %c0_98] : memref<8x128xf32, #tpu.memory_space<vmem>>, vector<8x128xf32>
    tpu.vector_store %arg9[%c0_97, %c0_98], %213 {strides = array<i32>} : memref<8x128xf32, #tpu.memory_space<vmem>>, vector<8x128xf32>,
    %c0_99 = arith.constant 0 : index
    %c0_100 = arith.constant 0 : index
    %217 = vector.load %arg8[%c0_99, %c0_100] : memref<8x128xf32, #tpu.memory_space<vmem>>, vector<8x128xf32>
    tpu.vector_store %arg8[%c0_99, %c0_100], %215 {strides = array<i32>} : memref<8x128xf32, #tpu.memory_space<vmem>>, vector<8x128xf32>,
    %c6_i32 = arith.constant 6 : i32
    %218 = arith.index_cast %c6_i32 : i32 to index
    %c0_101 = arith.constant 0 : index
    %c0_102 = arith.constant 0 : index
    %219 = vector.load %arg7[%218, %c0_101, %c0_102] : memref<8x8x512xf32, #tpu.memory_space<vmem>>, vector<1x8x512xf32>
    %220 = vector.shape_cast %219 : vector<1x8x512xf32> to vector<8x512xf32>
    %c0_103 = arith.constant 0 : index
    %c0_104 = arith.constant 0 : index
    %221 = vector.load %arg8[%c0_103, %c0_104] : memref<8x128xf32, #tpu.memory_space<vmem>>, vector<8x128xf32>
    %cst_105 = arith.constant dense<0.000000e+00> : vector<8x512xf32>
    %222 = tpu.matmul %221, %13, %cst_105 {dimension_numbers = #tpu.dot_dimension_numbers<[1], [0], [0], [1], [0, 0, 1, 1], [], []>} : vector<8x128xf32>, vector<128x512xf32>, vector<8x512xf32> -> vector<8x512xf32>
    %223 = arith.addf %220, %222 : vector<8x512xf32>
    %224 = vector.extract_strided_slice %223 {offsets = [0, 0], sizes = [8, 128], strides = [1, 1]} : vector<8x512xf32> to vector<8x128xf32>
    %225 = arith.negf %224 : vector<8x128xf32>
    %226 = math.exp %225 : vector<8x128xf32>
    %cst_106 = arith.constant 1.000000e+00 : f32
    %227 = vector.broadcast %cst_106 : f32 to vector<8x128xf32>
    %228 = arith.addf %227, %226 : vector<8x128xf32>
    %229 = arith.divf %227, %228 : vector<8x128xf32>
    %230 = vector.extract_strided_slice %223 {offsets = [0, 128], sizes = [8, 128], strides = [1, 1]} : vector<8x512xf32> to vector<8x128xf32>
    %231 = arith.negf %230 : vector<8x128xf32>
    %232 = math.exp %231 : vector<8x128xf32>
    %cst_107 = arith.constant 1.000000e+00 : f32
    %233 = vector.broadcast %cst_107 : f32 to vector<8x128xf32>
    %234 = arith.addf %233, %232 : vector<8x128xf32>
    %235 = arith.divf %233, %234 : vector<8x128xf32>
    %236 = vector.extract_strided_slice %223 {offsets = [0, 256], sizes = [8, 128], strides = [1, 1]} : vector<8x512xf32> to vector<8x128xf32>
    %237 = math.tanh %236 : vector<8x128xf32>
    %238 = vector.extract_strided_slice %223 {offsets = [0, 384], sizes = [8, 128], strides = [1, 1]} : vector<8x512xf32> to vector<8x128xf32>
    %239 = arith.negf %238 : vector<8x128xf32>
    %240 = math.exp %239 : vector<8x128xf32>
    %cst_108 = arith.constant 1.000000e+00 : f32
    %241 = vector.broadcast %cst_108 : f32 to vector<8x128xf32>
    %242 = arith.addf %241, %240 : vector<8x128xf32>
    %243 = arith.divf %241, %242 : vector<8x128xf32>
    %c0_109 = arith.constant 0 : index
    %c0_110 = arith.constant 0 : index
    %244 = vector.load %arg9[%c0_109, %c0_110] : memref<8x128xf32, #tpu.memory_space<vmem>>, vector<8x128xf32>
    %245 = arith.mulf %235, %244 : vector<8x128xf32>
    %246 = arith.mulf %229, %237 : vector<8x128xf32>
    %247 = arith.addf %245, %246 : vector<8x128xf32>
    %248 = math.tanh %247 : vector<8x128xf32>
    %249 = arith.mulf %243, %248 : vector<8x128xf32>
    %c0_111 = arith.constant 0 : index
    %c0_112 = arith.constant 0 : index
    %250 = vector.load %arg9[%c0_111, %c0_112] : memref<8x128xf32, #tpu.memory_space<vmem>>, vector<8x128xf32>
    tpu.vector_store %arg9[%c0_111, %c0_112], %247 {strides = array<i32>} : memref<8x128xf32, #tpu.memory_space<vmem>>, vector<8x128xf32>,
    %c0_113 = arith.constant 0 : index
    %c0_114 = arith.constant 0 : index
    %251 = vector.load %arg8[%c0_113, %c0_114] : memref<8x128xf32, #tpu.memory_space<vmem>>, vector<8x128xf32>
    tpu.vector_store %arg8[%c0_113, %c0_114], %249 {strides = array<i32>} : memref<8x128xf32, #tpu.memory_space<vmem>>, vector<8x128xf32>,
    %c7_i32 = arith.constant 7 : i32
    %252 = arith.index_cast %c7_i32 : i32 to index
    %c0_115 = arith.constant 0 : index
    %c0_116 = arith.constant 0 : index
    %253 = vector.load %arg7[%252, %c0_115, %c0_116] : memref<8x8x512xf32, #tpu.memory_space<vmem>>, vector<1x8x512xf32>
    %254 = vector.shape_cast %253 : vector<1x8x512xf32> to vector<8x512xf32>
    %c0_117 = arith.constant 0 : index
    %c0_118 = arith.constant 0 : index
    %255 = vector.load %arg8[%c0_117, %c0_118] : memref<8x128xf32, #tpu.memory_space<vmem>>, vector<8x128xf32>
    %cst_119 = arith.constant dense<0.000000e+00> : vector<8x512xf32>
    %256 = tpu.matmul %255, %13, %cst_119 {dimension_numbers = #tpu.dot_dimension_numbers<[1], [0], [0], [1], [0, 0, 1, 1], [], []>} : vector<8x128xf32>, vector<128x512xf32>, vector<8x512xf32> -> vector<8x512xf32>
    %257 = arith.addf %254, %256 : vector<8x512xf32>
    %258 = vector.extract_strided_slice %257 {offsets = [0, 0], sizes = [8, 128], strides = [1, 1]} : vector<8x512xf32> to vector<8x128xf32>
    %259 = arith.negf %258 : vector<8x128xf32>
    %260 = math.exp %259 : vector<8x128xf32>
    %cst_120 = arith.constant 1.000000e+00 : f32
    %261 = vector.broadcast %cst_120 : f32 to vector<8x128xf32>
    %262 = arith.addf %261, %260 : vector<8x128xf32>
    %263 = arith.divf %261, %262 : vector<8x128xf32>
    %264 = vector.extract_strided_slice %257 {offsets = [0, 128], sizes = [8, 128], strides = [1, 1]} : vector<8x512xf32> to vector<8x128xf32>
    %265 = arith.negf %264 : vector<8x128xf32>
    %266 = math.exp %265 : vector<8x128xf32>
    %cst_121 = arith.constant 1.000000e+00 : f32
    %267 = vector.broadcast %cst_121 : f32 to vector<8x128xf32>
    %268 = arith.addf %267, %266 : vector<8x128xf32>
    %269 = arith.divf %267, %268 : vector<8x128xf32>
    %270 = vector.extract_strided_slice %257 {offsets = [0, 256], sizes = [8, 128], strides = [1, 1]} : vector<8x512xf32> to vector<8x128xf32>
    %271 = math.tanh %270 : vector<8x128xf32>
    %272 = vector.extract_strided_slice %257 {offsets = [0, 384], sizes = [8, 128], strides = [1, 1]} : vector<8x512xf32> to vector<8x128xf32>
    %273 = arith.negf %272 : vector<8x128xf32>
    %274 = math.exp %273 : vector<8x128xf32>
    %cst_122 = arith.constant 1.000000e+00 : f32
    %275 = vector.broadcast %cst_122 : f32 to vector<8x128xf32>
    %276 = arith.addf %275, %274 : vector<8x128xf32>
    %277 = arith.divf %275, %276 : vector<8x128xf32>
    %c0_123 = arith.constant 0 : index
    %c0_124 = arith.constant 0 : index
    %278 = vector.load %arg9[%c0_123, %c0_124] : memref<8x128xf32, #tpu.memory_space<vmem>>, vector<8x128xf32>
    %279 = arith.mulf %269, %278 : vector<8x128xf32>
    %280 = arith.mulf %263, %271 : vector<8x128xf32>
    %281 = arith.addf %279, %280 : vector<8x128xf32>
    %282 = math.tanh %281 : vector<8x128xf32>
    %283 = arith.mulf %277, %282 : vector<8x128xf32>
    %c0_125 = arith.constant 0 : index
    %c0_126 = arith.constant 0 : index
    %284 = vector.load %arg9[%c0_125, %c0_126] : memref<8x128xf32, #tpu.memory_space<vmem>>, vector<8x128xf32>
    tpu.vector_store %arg9[%c0_125, %c0_126], %281 {strides = array<i32>} : memref<8x128xf32, #tpu.memory_space<vmem>>, vector<8x128xf32>,
    %c0_127 = arith.constant 0 : index
    %c0_128 = arith.constant 0 : index
    %285 = vector.load %arg8[%c0_127, %c0_128] : memref<8x128xf32, #tpu.memory_space<vmem>>, vector<8x128xf32>
    tpu.vector_store %arg8[%c0_127, %c0_128], %283 {strides = array<i32>} : memref<8x128xf32, #tpu.memory_space<vmem>>, vector<8x128xf32>,
    %c8_i32 = arith.constant 8 : i32
    %c0_129 = arith.constant 0 : index
    %c0_130 = arith.constant 0 : index
    %286 = vector.load %arg8[%c0_129, %c0_130] : memref<8x128xf32, #tpu.memory_space<vmem>>, vector<8x128xf32>
    %c0_131 = arith.constant 0 : index
    %c0_132 = arith.constant 0 : index
    %287 = vector.load %arg4[%c0_131, %c0_132] : memref<128x128xf32, #tpu.memory_space<vmem>>, vector<128x128xf32>
    %cst_133 = arith.constant dense<0.000000e+00> : vector<8x128xf32>
    %288 = tpu.matmul %286, %287, %cst_133 {dimension_numbers = #tpu.dot_dimension_numbers<[1], [0], [0], [1], [0, 0, 1, 1], [], []>} : vector<8x128xf32>, vector<128x128xf32>, vector<8x128xf32> -> vector<8x128xf32>
    %c0_134 = arith.constant 0 : index
    %c0_135 = arith.constant 0 : index
    %289 = vector.load %arg5[%c0_134, %c0_135] : memref<1x128xf32, #tpu.memory_space<vmem>>, vector<1x128xf32>
    %290 = vector.broadcast %289 : vector<1x128xf32> to vector<8x128xf32>
    %291 = arith.addf %288, %290 : vector<8x128xf32>
    %c0_136 = arith.constant 0 : index
    %c0_137 = arith.constant 0 : index
    %292 = vector.load %arg6[%c0_136, %c0_137] : memref<8x128xf32, #tpu.memory_space<vmem>>, vector<8x128xf32>
    tpu.vector_store %arg6[%c0_136, %c0_137], %291 {strides = array<i32>} : memref<8x128xf32, #tpu.memory_space<vmem>>, vector<8x128xf32>,
    return
  }
}

</mosaic_0001>

<llo_original>
// kernel: tpu_custom_call.1
$region0: #{tpu_custom_call.1}
  #allocation0 [shape = 'u32[]', space=smem, size = 0x4, offset = 0x4, fixed_abs, tag = 'smem constant byte address 0x4 - core index']
  #allocation1 [shape = 'u32[72,128]{1,0:T(1,128)}', space=vmem, size = 0x9000, scoped, tag = 'internal scratch']
  #allocation2 [shape = 'f32[8,8,512]{2,1,0:T(8,128)}', space=vmem, size = 0x20000, scoped, tag = 'scratch operand']
  #allocation3 [shape = 'f32[8,128]{1,0:T(8,128)}', space=vmem, size = 0x1000, scoped, tag = 'scratch operand']
  #allocation4 [shape = 'f32[8,128]{1,0:T(8,128)}', space=vmem, size = 0x1000, scoped, tag = 'scratch operand']
  %s0 = inlined_call_operand.hbm [shape: f32[8,8,128], index: 0, kind: input, shape index: {}]
  %s1 = inlined_call_operand.hbm [shape: f32[128,512], index: 1, kind: input, shape index: {}]
  %s2 = inlined_call_operand.hbm [shape: f32[128,512], index: 2, kind: input, shape index: {}]
  %s3 = inlined_call_operand.hbm [shape: f32[1,512], index: 3, kind: input, shape index: {}]
  %s4 = inlined_call_operand.hbm [shape: f32[128,128], index: 4, kind: input, shape index: {}]
  %s5 = inlined_call_operand.vmem [shape: f32[1,128], index: 5, kind: input, shape index: {}]
  %s6 = inlined_call_operand.hbm [shape: f32[8,128], index: 6, kind: output, shape index: {}]
  %s7 = sld [smem:[#allocation0]]
  $region54: #{tpu_custom_call.1} parent=0
    _
  %s9 = ssub.s32 1, %s7
  %s10 = scalar_select 0, %s9, %s7
  $region1: #{tpu_custom_call.1} parent=0
    #allocation5 [shape = 'u8[32768]{0}', space=vmem, size = 0x8000, scoped, tag = 'input window, operand 0, single buffered']
    #allocation6 [shape = 's32[1]{0}', space=sflag, size = 0x4, scoped, tag = 'scoped memory for tpu_custom_call.1']
    #allocation7 [shape = 's32[1]{0}', space=sflag, size = 0x4, scoped, tag = 'scoped memory for tpu_custom_call.1']
    #allocation8 [shape = 'u8[262144]{0}', space=vmem, size = 0x40000, scoped, tag = 'input window, operand 1, single buffered']
    #allocation9 [shape = 's32[1]{0}', space=sflag, size = 0x4, scoped, tag = 'scoped memory for tpu_custom_call.1']
    #allocation10 [shape = 'u8[262144]{0}', space=vmem, size = 0x40000, scoped, tag = 'input window, operand 2, single buffered']
    #allocation11 [shape = 'u8[2048]{0}', space=vmem, size = 0x800, scoped, tag = 'input window, operand 3, single buffered']
    #allocation12 [shape = 's32[1]{0}', space=sflag, size = 0x4, scoped, tag = 'scoped memory for tpu_custom_call.1']
    #allocation13 [shape = 'u8[65536]{0}', space=vmem, size = 0x10000, scoped, tag = 'input window, operand 4, single buffered']
    #allocation14 [shape = 'u8[4096]{0}', space=vmem, size = 0x1000, scoped, tag = 'output window, operand 0, single buffered']
    %11 = vsyncpa [#allocation6], 0
    %12 = vsyncpa [#allocation9], 0
    %13 = vsyncpa [#allocation12], 0
    %14 = vsyncpa [#allocation7], 0
    // Predicated region
    $region2: #{tpu_custom_call.1} parent=1 // pred_check
      _
    $region3: #{tpu_custom_call.1} parent=1 // pred_check_branch
      %16 = sbr.rel (0) target = $region5
    $region4: #{tpu_custom_call.1} parent=1 // pred_region
      %18 = vsyncadd [#allocation6], 0
      %s19 = sshll.u32 %s0, 4
      %s20 = int_to_ptr.hbm [resolvable:$true] %s19
      %s21 = sshll.u32 [#allocation5], 4
      %s22 = int_to_ptr.vmem [resolvable:$true] %s21
      %27 = dma.hbm_to_vmem [thread:$0]  %s20, 1024, %s22, [#allocation6], 128, 128, 8
    $region5: #{tpu_custom_call.1} parent=1 // pred_fallthru
      _
    // Predicated region
    $region6: #{tpu_custom_call.1} parent=1 // pred_check
      _
    $region7: #{tpu_custom_call.1} parent=1 // pred_check_branch
      %29 = sbr.rel (0) target = $region9
    $region8: #{tpu_custom_call.1} parent=1 // pred_region
      %31 = vsyncadd [#allocation9], 0
      %s32 = sshll.u32 %s1, 4
      %s33 = int_to_ptr.hbm [resolvable:$true] %s32
      %s34 = sshll.u32 [#allocation8], 4
      %s35 = int_to_ptr.vmem [resolvable:$true] %s34
      %40 = dma.hbm_to_vmem [thread:$0]  %s33, 8192, %s35, [#allocation9], 512, 512, 32
    $region9: #{tpu_custom_call.1} parent=1 // pred_fallthru
      _
    // Predicated region
    $region10: #{tpu_custom_call.1} parent=1 // pred_check
      _
    $region11: #{tpu_custom_call.1} parent=1 // pred_check_branch
      %42 = sbr.rel (0) target = $region13
    $region12: #{tpu_custom_call.1} parent=1 // pred_region
      %44 = vsyncadd [#allocation9], 0
      %s45 = sshll.u32 %s2, 4
      %s46 = int_to_ptr.hbm [resolvable:$true] %s45
      %s47 = sshll.u32 [#allocation10], 4
      %s48 = int_to_ptr.vmem [resolvable:$true] %s47
      %53 = dma.hbm_to_vmem [thread:$0]  %s46, 8192, %s48, [#allocation9], 512, 512, 32
    $region13: #{tpu_custom_call.1} parent=1 // pred_fallthru
      _
    // Predicated region
    $region14: #{tpu_custom_call.1} parent=1 // pred_check
      _
    $region15: #{tpu_custom_call.1} parent=1 // pred_check_branch
      %55 = sbr.rel (0) target = $region17
    $region16: #{tpu_custom_call.1} parent=1 // pred_region
      %57 = vsyncadd [#allocation12], 0
      %s59 = sshll.u32 %s3, 4
      %s60 = int_to_ptr.hbm [resolvable:$true] %s59
      %s61 = sshll.u32 [#allocation11], 4
      %s62 = int_to_ptr.vmem [resolvable:$true] %s61
      %64 = dma.hbm_to_vmem [thread:$0]  %s60, 64, %s62, [#allocation12]
    $region17: #{tpu_custom_call.1} parent=1 // pred_fallthru
      _
    // Predicated region
    $region18: #{tpu_custom_call.1} parent=1 // pred_check
      _
    $region19: #{tpu_custom_call.1} parent=1 // pred_check_branch
      %66 = sbr.rel (0) target = $region21
    $region20: #{tpu_custom_call.1} parent=1 // pred_region
      %68 = vsyncadd [#allocation12], 0
      %s69 = sshll.u32 %s4, 4
      %s70 = int_to_ptr.hbm [resolvable:$true] %s69
      %s71 = sshll.u32 [#allocation13], 4
      %s72 = int_to_ptr.vmem [resolvable:$true] %s71
      %77 = dma.hbm_to_vmem [thread:$0]  %s70, 2048, %s72, [#allocation12], 128, 128, 8
    $region21: #{tpu_custom_call.1} parent=1 // pred_fallthru
      _
    // Predicated region
    $region22: #{tpu_custom_call.1} parent=1 // pred_check
      _
    $region23: #{tpu_custom_call.1} parent=1 // pred_check_branch
      %79 = sbr.rel (0) target = $region25
    $region24: #{tpu_custom_call.1} parent=1 // pred_region
      _
    $region25: #{tpu_custom_call.1} parent=1 // pred_fallthru
      _
    // Predicated region
    $region26: #{tpu_custom_call.1} parent=1 // pred_check
      _
    $region27: #{tpu_custom_call.1} parent=1 // pred_check_branch
      %81 = sbr.rel (0) target = $region29
    $region28: #{tpu_custom_call.1} parent=1 // pred_region
      %83 = dma.done [#allocation6], 1024
    $region29: #{tpu_custom_call.1} parent=1 // pred_fallthru
      _
    // Predicated region
    $region30: #{tpu_custom_call.1} parent=1 // pred_check
      _
    $region31: #{tpu_custom_call.1} parent=1 // pred_check_branch
      %85 = sbr.rel (0) target = $region33
    $region32: #{tpu_custom_call.1} parent=1 // pred_region
      %87 = dma.done [#allocation9], 8192
    $region33: #{tpu_custom_call.1} parent=1 // pred_fallthru
      _
    // Predicated region
    $region34: #{tpu_custom_call.1} parent=1 // pred_check
      _
    $region35: #{tpu_custom_call.1} parent=1 // pred_check_branch
      %89 = sbr.rel (0) target = $region37
    $region36: #{tpu_custom_call.1} parent=1 // pred_region
      %91 = dma.done [#allocation9], 8192
    $region37: #{tpu_custom_call.1} parent=1 // pred_fallthru
      _
    // Predicated region
    $region38: #{tpu_custom_call.1} parent=1 // pred_check
      _
    $region39: #{tpu_custom_call.1} parent=1 // pred_check_branch
      %93 = sbr.rel (0) target = $region41
    $region40: #{tpu_custom_call.1} parent=1 // pred_region
      %95 = dma.done [#allocation12], 64
    $region41: #{tpu_custom_call.1} parent=1 // pred_fallthru
      _
    // Predicated region
    $region42: #{tpu_custom_call.1} parent=1 // pred_check
      _
    $region43: #{tpu_custom_call.1} parent=1 // pred_check_branch
      %97 = sbr.rel (0) target = $region45
    $region44: #{tpu_custom_call.1} parent=1 // pred_region
      %99 = dma.done [#allocation12], 2048
    $region45: #{tpu_custom_call.1} parent=1 // pred_fallthru
      _
    %v100 = vld [vmem:[#allocation5] sm:$0xff]
    %v101 = vld [vmem:[#allocation5 + $0x8] sm:$0xff]
    %v102 = vld [vmem:[#allocation5 + $0x10] sm:$0xff]
    %v103 = vld [vmem:[#allocation5 + $0x18] sm:$0xff]
    %v104 = vld [vmem:[#allocation5 + $0x20] sm:$0xff]
    %v105 = vld [vmem:[#allocation5 + $0x28] sm:$0xff]
    %v106 = vld [vmem:[#allocation5 + $0x30] sm:$0xff]
    %v107 = vld [vmem:[#allocation5 + $0x38] sm:$0xff]
    %v108 = vld [vmem:[#allocation8] sm:$0xff]
    %v109 = vld [vmem:[#allocation8 + $0x8] sm:$0xff]
    %v110 = vld [vmem:[#allocation8 + $0x10] sm:$0xff]
    %v111 = vld [vmem:[#allocation8 + $0x18] sm:$0xff]
    %v112 = vld [vmem:[#allocation8 + $0x20] sm:$0xff]
    %v113 = vld [vmem:[#allocation8 + $0x28] sm:$0xff]
    %v114 = vld [vmem:[#allocation8 + $0x30] sm:$0xff]
    %v115 = vld [vmem:[#allocation8 + $0x38] sm:$0xff]
    %v116 = vld [vmem:[#allocation8 + $0x40] sm:$0xff]
    %v117 = vld [vmem:[#allocation8 + $0x48] sm:$0xff]
    %v118 = vld [vmem:[#allocation8 + $0x50] sm:$0xff]
    %v119 = vld [vmem:[#allocation8 + $0x58] sm:$0xff]
    %v120 = vld [vmem:[#allocation8 + $0x60] sm:$0xff]
    %v121 = vld [vmem:[#allocation8 + $0x68] sm:$0xff]
    %v122 = vld [vmem:[#allocation8 + $0x70] sm:$0xff]
    %v123 = vld [vmem:[#allocation8 + $0x78] sm:$0xff]
    %v124 = vld [vmem:[#allocation8 + $0x80] sm:$0xff]
    %v125 = vld [vmem:[#allocation8 + $0x88] sm:$0xff]
    %v126 = vld [vmem:[#allocation8 + $0x90] sm:$0xff]
    %v127 = vld [vmem:[#allocation8 + $0x98] sm:$0xff]
    %v128 = vld [vmem:[#allocation8 + $0xa0] sm:$0xff]
    %v129 = vld [vmem:[#allocation8 + $0xa8] sm:$0xff]
    %v130 = vld [vmem:[#allocation8 + $0xb0] sm:$0xff]
    %v131 = vld [vmem:[#allocation8 + $0xb8] sm:$0xff]
    %v132 = vld [vmem:[#allocation8 + $0xc0] sm:$0xff]
    %v133 = vld [vmem:[#allocation8 + $0xc8] sm:$0xff]
    %v134 = vld [vmem:[#allocation8 + $0xd0] sm:$0xff]
    %v135 = vld [vmem:[#allocation8 + $0xd8] sm:$0xff]
    %v136 = vld [vmem:[#allocation8 + $0xe0] sm:$0xff]
    %v137 = vld [vmem:[#allocation8 + $0xe8] sm:$0xff]
    %v138 = vld [vmem:[#allocation8 + $0xf0] sm:$0xff]
    %v139 = vld [vmem:[#allocation8 + $0xf8] sm:$0xff]
    %v140 = vld [vmem:[#allocation8 + $0x100] sm:$0xff]
    %v141 = vld [vmem:[#allocation8 + $0x108] sm:$0xff]
    %v142 = vld [vmem:[#allocation8 + $0x110] sm:$0xff]
    %v143 = vld [vmem:[#allocation8 + $0x118] sm:$0xff]
    %v144 = vld [vmem:[#allocation8 + $0x120] sm:$0xff]
    %v145 = vld [vmem:[#allocation8 + $0x128] sm:$0xff]
    %v146 = vld [vmem:[#allocation8 + $0x130] sm:$0xff]
    %v147 = vld [vmem:[#allocation8 + $0x138] sm:$0xff]
    %v148 = vld [vmem:[#allocation8 + $0x140] sm:$0xff]
    %v149 = vld [vmem:[#allocation8 + $0x148] sm:$0xff]
    %v150 = vld [vmem:[#allocation8 + $0x150] sm:$0xff]
    %v151 = vld [vmem:[#allocation8 + $0x158] sm:$0xff]
    %v152 = vld [vmem:[#allocation8 + $0x160] sm:$0xff]
    %v153 = vld [vmem:[#allocation8 + $0x168] sm:$0xff]
    %v154 = vld [vmem:[#allocation8 + $0x170] sm:$0xff]
    %v155 = vld [vmem:[#allocation8 + $0x178] sm:$0xff]
    %v156 = vld [vmem:[#allocation8 + $0x180] sm:$0xff]
    %v157 = vld [vmem:[#allocation8 + $0x188] sm:$0xff]
    %v158 = vld [vmem:[#allocation8 + $0x190] sm:$0xff]
    %v159 = vld [vmem:[#allocation8 + $0x198] sm:$0xff]
    %v160 = vld [vmem:[#allocation8 + $0x1a0] sm:$0xff]
    %v161 = vld [vmem:[#allocation8 + $0x1a8] sm:$0xff]
    %v162 = vld [vmem:[#allocation8 + $0x1b0] sm:$0xff]
    %v163 = vld [vmem:[#allocation8 + $0x1b8] sm:$0xff]
    %v164 = vld [vmem:[#allocation8 + $0x1c0] sm:$0xff]
    %v165 = vld [vmem:[#allocation8 + $0x1c8] sm:$0xff]
    %v166 = vld [vmem:[#allocation8 + $0x1d0] sm:$0xff]
    %v167 = vld [vmem:[#allocation8 + $0x1d8] sm:$0xff]
    %v168 = vld [vmem:[#allocation8 + $0x1e0] sm:$0xff]
    %v169 = vld [vmem:[#allocation8 + $0x1e8] sm:$0xff]
    %v170 = vld [vmem:[#allocation8 + $0x1f0] sm:$0xff]
    %v171 = vld [vmem:[#allocation8 + $0x1f8] sm:$0xff]
    %v172 = vld [vmem:[#allocation11] sm:$0xf]
    %v174 = vperm.slane %v172, 0
    %v175 = vperm.slane %v172, 1
    %v176 = vperm.slane %v172, 2
    %v177 = vperm.slane %v172, 3
    %182 = vmatpush.msra.mxu0 %v168
    %183 = vmatpush.msra.mxu0 %v164
    %184 = vmatpush.msra.mxu0 %v160
    %185 = vmatpush.msra.mxu0 %v156
    %186 = vmatpush.msra.mxu0 %v152
    %187 = vmatpush.msra.mxu0 %v148
    %188 = vmatpush.msra.mxu0 %v144
    %189 = vmatpush.msra.mxu0 %v140
    %190 = vmatpush.msra.mxu0 %v136
    %191 = vmatpush.msra.mxu0 %v132
    %192 = vmatpush.msra.mxu0 %v128
    %193 = vmatpush.msra.mxu0 %v124
    %194 = vmatpush.msra.mxu0 %v120
    %195 = vmatpush.msra.mxu0 %v116
    %196 = vmatpush.msra.mxu0 %v112
    %197 = vmatpush.msra.mxu0 %v108
    %198 = vmatmul.f32.gmra.mxu0 %v100
    %v199 = vpop.f32.mrf.mxu0
    %v200 = vadd.f32 %v174, %v199
    %201 = vmatmul.f32.gmra.mxu0 %v101
    %v202 = vpop.f32.mrf.mxu0
    %v203 = vadd.f32 %v174, %v202
    %204 = vmatmul.f32.gmra.mxu0 %v102
    %v205 = vpop.f32.mrf.mxu0
    %v206 = vadd.f32 %v174, %v205
    %207 = vmatmul.f32.gmra.mxu0 %v103
    %v208 = vpop.f32.mrf.mxu0
    %v209 = vadd.f32 %v174, %v208
    %210 = vmatmul.f32.gmra.mxu0 %v104
    %v211 = vpop.f32.mrf.mxu0
    %v212 = vadd.f32 %v174, %v211
    %213 = vmatmul.f32.gmra.mxu0 %v105
    %v214 = vpop.f32.mrf.mxu0
    %v215 = vadd.f32 %v174, %v214
    %216 = vmatmul.f32.gmra.mxu0 %v106
    %v217 = vpop.f32.mrf.mxu0
    %v218 = vadd.f32 %v174, %v217
    %219 = vmatmul.f32.gmra.mxu0 %v107
    %v220 = vpop.f32.mrf.mxu0
    %v221 = vadd.f32 %v174, %v220
    %222 = vdwg.mxu0
    %223 = vmatpush.msra.mxu0 %v169
    %224 = vmatpush.msra.mxu0 %v165
    %225 = vmatpush.msra.mxu0 %v161
    %226 = vmatpush.msra.mxu0 %v157
    %227 = vmatpush.msra.mxu0 %v153
    %228 = vmatpush.msra.mxu0 %v149
    %229 = vmatpush.msra.mxu0 %v145
    %230 = vmatpush.msra.mxu0 %v141
    %231 = vmatpush.msra.mxu0 %v137
    %232 = vmatpush.msra.mxu0 %v133
    %233 = vmatpush.msra.mxu0 %v129
    %234 = vmatpush.msra.mxu0 %v125
    %235 = vmatpush.msra.mxu0 %v121
    %236 = vmatpush.msra.mxu0 %v117
    %237 = vmatpush.msra.mxu0 %v113
    %238 = vmatpush.msra.mxu0 %v109
    %239 = vmatmul.f32.gmra.mxu0 %v100
    %v240 = vpop.f32.mrf.mxu0
    %v241 = vadd.f32 %v175, %v240
    %242 = vmatmul.f32.gmra.mxu0 %v101
    %v243 = vpop.f32.mrf.mxu0
    %v244 = vadd.f32 %v175, %v243
    %245 = vmatmul.f32.gmra.mxu0 %v102
    %v246 = vpop.f32.mrf.mxu0
    %v247 = vadd.f32 %v175, %v246
    %248 = vmatmul.f32.gmra.mxu0 %v103
    %v249 = vpop.f32.mrf.mxu0
    %v250 = vadd.f32 %v175, %v249
    %251 = vmatmul.f32.gmra.mxu0 %v104
    %v252 = vpop.f32.mrf.mxu0
    %v253 = vadd.f32 %v175, %v252
    %254 = vmatmul.f32.gmra.mxu0 %v105
    %v255 = vpop.f32.mrf.mxu0
    %v256 = vadd.f32 %v175, %v255
    %257 = vmatmul.f32.gmra.mxu0 %v106
    %v258 = vpop.f32.mrf.mxu0
    %v259 = vadd.f32 %v175, %v258
    %260 = vmatmul.f32.gmra.mxu0 %v107
    %v261 = vpop.f32.mrf.mxu0
    %v262 = vadd.f32 %v175, %v261
    %263 = vdwg.mxu0
    %264 = vmatpush.msra.mxu0 %v170
    %265 = vmatpush.msra.mxu0 %v166
    %266 = vmatpush.msra.mxu0 %v162
    %267 = vmatpush.msra.mxu0 %v158
    %268 = vmatpush.msra.mxu0 %v154
    %269 = vmatpush.msra.mxu0 %v150
    %270 = vmatpush.msra.mxu0 %v146
    %271 = vmatpush.msra.mxu0 %v142
    %272 = vmatpush.msra.mxu0 %v138
    %273 = vmatpush.msra.mxu0 %v134
    %274 = vmatpush.msra.mxu0 %v130
    %275 = vmatpush.msra.mxu0 %v126
    %276 = vmatpush.msra.mxu0 %v122
    %277 = vmatpush.msra.mxu0 %v118
    %278 = vmatpush.msra.mxu0 %v114
    %279 = vmatpush.msra.mxu0 %v110
    %280 = vmatmul.f32.gmra.mxu0 %v100
    %v281 = vpop.f32.mrf.mxu0
    %v282 = vadd.f32 %v176, %v281
    %283 = vmatmul.f32.gmra.mxu0 %v101
    %v284 = vpop.f32.mrf.mxu0
    %v285 = vadd.f32 %v176, %v284
    %286 = vmatmul.f32.gmra.mxu0 %v102
    %v287 = vpop.f32.mrf.mxu0
    %v288 = vadd.f32 %v176, %v287
    %289 = vmatmul.f32.gmra.mxu0 %v103
    %v290 = vpop.f32.mrf.mxu0
    %v291 = vadd.f32 %v176, %v290
    %292 = vmatmul.f32.gmra.mxu0 %v104
    %v293 = vpop.f32.mrf.mxu0
    %v294 = vadd.f32 %v176, %v293
    %295 = vmatmul.f32.gmra.mxu0 %v105
    %v296 = vpop.f32.mrf.mxu0
    %v297 = vadd.f32 %v176, %v296
    %298 = vmatmul.f32.gmra.mxu0 %v106
    %v299 = vpop.f32.mrf.mxu0
    %v300 = vadd.f32 %v176, %v299
    %301 = vmatmul.f32.gmra.mxu0 %v107
    %v302 = vpop.f32.mrf.mxu0
    %v303 = vadd.f32 %v176, %v302
    %304 = vdwg.mxu0
    %305 = vmatpush.msra.mxu0 %v171
    %306 = vmatpush.msra.mxu0 %v167
    %307 = vmatpush.msra.mxu0 %v163
    %308 = vmatpush.msra.mxu0 %v159
    %309 = vmatpush.msra.mxu0 %v155
    %310 = vmatpush.msra.mxu0 %v151
    %311 = vmatpush.msra.mxu0 %v147
    %312 = vmatpush.msra.mxu0 %v143
    %313 = vmatpush.msra.mxu0 %v139
    %314 = vmatpush.msra.mxu0 %v135
    %315 = vmatpush.msra.mxu0 %v131
    %316 = vmatpush.msra.mxu0 %v127
    %317 = vmatpush.msra.mxu0 %v123
    %318 = vmatpush.msra.mxu0 %v119
    %319 = vmatpush.msra.mxu0 %v115
    %320 = vmatpush.msra.mxu0 %v111
    %321 = vmatmul.f32.gmra.mxu0 %v100
    %v322 = vpop.f32.mrf.mxu0
    %v323 = vadd.f32 %v177, %v322
    %324 = vmatmul.f32.gmra.mxu0 %v101
    %v325 = vpop.f32.mrf.mxu0
    %v326 = vadd.f32 %v177, %v325
    %327 = vmatmul.f32.gmra.mxu0 %v102
    %v328 = vpop.f32.mrf.mxu0
    %v329 = vadd.f32 %v177, %v328
    %330 = vmatmul.f32.gmra.mxu0 %v103
    %v331 = vpop.f32.mrf.mxu0
    %v332 = vadd.f32 %v177, %v331
    %333 = vmatmul.f32.gmra.mxu0 %v104
    %v334 = vpop.f32.mrf.mxu0
    %v335 = vadd.f32 %v177, %v334
    %336 = vmatmul.f32.gmra.mxu0 %v105
    %v337 = vpop.f32.mrf.mxu0
    %v338 = vadd.f32 %v177, %v337
    %339 = vmatmul.f32.gmra.mxu0 %v106
    %v340 = vpop.f32.mrf.mxu0
    %v341 = vadd.f32 %v177, %v340
    %342 = vmatmul.f32.gmra.mxu0 %v107
    %v343 = vpop.f32.mrf.mxu0
    %v344 = vadd.f32 %v177, %v343
    %345 = vdwg.mxu0
    %346 = vst [vmem:[#allocation2] sm:$0xff] %v200
    %347 = vst [vmem:[#allocation2 + $0x8] sm:$0xff] %v241
    %348 = vst [vmem:[#allocation2 + $0x10] sm:$0xff] %v282
    %349 = vst [vmem:[#allocation2 + $0x18] sm:$0xff] %v323
    %350 = vst [vmem:[#allocation2 + $0x20] sm:$0xff] %v203
    %351 = vst [vmem:[#allocation2 + $0x28] sm:$0xff] %v244
    %352 = vst [vmem:[#allocation2 + $0x30] sm:$0xff] %v285
    %353 = vst [vmem:[#allocation2 + $0x38] sm:$0xff] %v326
    %354 = vst [vmem:[#allocation2 + $0x40] sm:$0xff] %v206
    %355 = vst [vmem:[#allocation2 + $0x48] sm:$0xff] %v247
    %356 = vst [vmem:[#allocation2 + $0x50] sm:$0xff] %v288
    %357 = vst [vmem:[#allocation2 + $0x58] sm:$0xff] %v329
    %358 = vst [vmem:[#allocation2 + $0x60] sm:$0xff] %v209
    %359 = vst [vmem:[#allocation2 + $0x68] sm:$0xff] %v250
    %360 = vst [vmem:[#allocation2 + $0x70] sm:$0xff] %v291
    %361 = vst [vmem:[#allocation2 + $0x78] sm:$0xff] %v332
    %362 = vst [vmem:[#allocation2 + $0x80] sm:$0xff] %v212
    %363 = vst [vmem:[#allocation2 + $0x88] sm:$0xff] %v253
    %364 = vst [vmem:[#allocation2 + $0x90] sm:$0xff] %v294
    %365 = vst [vmem:[#allocation2 + $0x98] sm:$0xff] %v335
    %366 = vst [vmem:[#allocation2 + $0xa0] sm:$0xff] %v215
    %367 = vst [vmem:[#allocation2 + $0xa8] sm:$0xff] %v256
    %368 = vst [vmem:[#allocation2 + $0xb0] sm:$0xff] %v297
    %369 = vst [vmem:[#allocation2 + $0xb8] sm:$0xff] %v338
    %370 = vst [vmem:[#allocation2 + $0xc0] sm:$0xff] %v218
    %371 = vst [vmem:[#allocation2 + $0xc8] sm:$0xff] %v259
    %372 = vst [vmem:[#allocation2 + $0xd0] sm:$0xff] %v300
    %373 = vst [vmem:[#allocation2 + $0xd8] sm:$0xff] %v341
    %374 = vst [vmem:[#allocation2 + $0xe0] sm:$0xff] %v221
    %375 = vst [vmem:[#allocation2 + $0xe8] sm:$0xff] %v262
    %376 = vst [vmem:[#allocation2 + $0xf0] sm:$0xff] %v303
    %377 = vst [vmem:[#allocation2 + $0xf8] sm:$0xff] %v344
    %378 = vst [vmem:[#allocation3] sm:$0xff] 0.0
    %379 = vst [vmem:[#allocation4] sm:$0xff] 0.0
    %v380 = vld [vmem:[#allocation10] sm:$0xff]
    %v381 = vld [vmem:[#allocation10 + $0x8] sm:$0xff]
    %v382 = vld [vmem:[#allocation10 + $0x10] sm:$0xff]
    %v383 = vld [vmem:[#allocation10 + $0x18] sm:$0xff]
    %v384 = vld [vmem:[#allocation10 + $0x20] sm:$0xff]
    %v385 = vld [vmem:[#allocation10 + $0x28] sm:$0xff]
    %v386 = vld [vmem:[#allocation10 + $0x30] sm:$0xff]
    %v387 = vld [vmem:[#allocation10 + $0x38] sm:$0xff]
    %v388 = vld [vmem:[#allocation10 + $0x40] sm:$0xff]
    %v389 = vld [vmem:[#allocation10 + $0x48] sm:$0xff]
    %v390 = vld [vmem:[#allocation10 + $0x50] sm:$0xff]
    %v391 = vld [vmem:[#allocation10 + $0x58] sm:$0xff]
    %v392 = vld [vmem:[#allocation10 + $0x60] sm:$0xff]
    %v393 = vld [vmem:[#allocation10 + $0x68] sm:$0xff]
    %v394 = vld [vmem:[#allocation10 + $0x70] sm:$0xff]
    %v395 = vld [vmem:[#allocation10 + $0x78] sm:$0xff]
    %v396 = vld [vmem:[#allocation10 + $0x80] sm:$0xff]
    %v397 = vld [vmem:[#allocation10 + $0x88] sm:$0xff]
    %v398 = vld [vmem:[#allocation10 + $0x90] sm:$0xff]
    %v399 = vld [vmem:[#allocation10 + $0x98] sm:$0xff]
    %v400 = vld [vmem:[#allocation10 + $0xa0] sm:$0xff]
    %v401 = vld [vmem:[#allocation10 + $0xa8] sm:$0xff]
    %v402 = vld [vmem:[#allocation10 + $0xb0] sm:$0xff]
    %v403 = vld [vmem:[#allocation10 + $0xb8] sm:$0xff]
    %v404 = vld [vmem:[#allocation10 + $0xc0] sm:$0xff]
    %v405 = vld [vmem:[#allocation10 + $0xc8] sm:$0xff]
    %v406 = vld [vmem:[#allocation10 + $0xd0] sm:$0xff]
    %v407 = vld [vmem:[#allocation10 + $0xd8] sm:$0xff]
    %v408 = vld [vmem:[#allocation10 + $0xe0] sm:$0xff]
    %v409 = vld [vmem:[#allocation10 + $0xe8] sm:$0xff]
    %v410 = vld [vmem:[#allocation10 + $0xf0] sm:$0xff]
    %v411 = vld [vmem:[#allocation10 + $0xf8] sm:$0xff]
    %v412 = vld [vmem:[#allocation10 + $0x100] sm:$0xff]
    %v413 = vld [vmem:[#allocation10 + $0x108] sm:$0xff]
    %v414 = vld [vmem:[#allocation10 + $0x110] sm:$0xff]
    %v415 = vld [vmem:[#allocation10 + $0x118] sm:$0xff]
    %v416 = vld [vmem:[#allocation10 + $0x120] sm:$0xff]
    %v417 = vld [vmem:[#allocation10 + $0x128] sm:$0xff]
    %v418 = vld [vmem:[#allocation10 + $0x130] sm:$0xff]
    %v419 = vld [vmem:[#allocation10 + $0x138] sm:$0xff]
    %v420 = vld [vmem:[#allocation10 + $0x140] sm:$0xff]
    %v421 = vld [vmem:[#allocation10 + $0x148] sm:$0xff]
    %v422 = vld [vmem:[#allocation10 + $0x150] sm:$0xff]
    %v423 = vld [vmem:[#allocation10 + $0x158] sm:$0xff]
    %v424 = vld [vmem:[#allocation10 + $0x160] sm:$0xff]
    %v425 = vld [vmem:[#allocation10 + $0x168] sm:$0xff]
    %v426 = vld [vmem:[#allocation10 + $0x170] sm:$0xff]
    %v427 = vld [vmem:[#allocation10 + $0x178] sm:$0xff]
    %v428 = vld [vmem:[#allocation10 + $0x180] sm:$0xff]
    %v429 = vld [vmem:[#allocation10 + $0x188] sm:$0xff]
    %v430 = vld [vmem:[#allocation10 + $0x190] sm:$0xff]
    %v431 = vld [vmem:[#allocation10 + $0x198] sm:$0xff]
    %v432 = vld [vmem:[#allocation10 + $0x1a0] sm:$0xff]
    %v433 = vld [vmem:[#allocation10 + $0x1a8] sm:$0xff]
    %v434 = vld [vmem:[#allocation10 + $0x1b0] sm:$0xff]
    %v435 = vld [vmem:[#allocation10 + $0x1b8] sm:$0xff]
    %v436 = vld [vmem:[#allocation10 + $0x1c0] sm:$0xff]
    %v437 = vld [vmem:[#allocation10 + $0x1c8] sm:$0xff]
    %v438 = vld [vmem:[#allocation10 + $0x1d0] sm:$0xff]
    %v439 = vld [vmem:[#allocation10 + $0x1d8] sm:$0xff]
    %v440 = vld [vmem:[#allocation10 + $0x1e0] sm:$0xff]
    %v441 = vld [vmem:[#allocation10 + $0x1e8] sm:$0xff]
    %v442 = vld [vmem:[#allocation10 + $0x1f0] sm:$0xff]
    %v443 = vld [vmem:[#allocation10 + $0x1f8] sm:$0xff]
    %v444 = vld [vmem:[#allocation2] sm:$0xff]
    %v445 = vld [vmem:[#allocation2 + $0x8] sm:$0xff]
    %v446 = vld [vmem:[#allocation2 + $0x10] sm:$0xff]
    %v447 = vld [vmem:[#allocation2 + $0x18] sm:$0xff]
    %v448 = vld [vmem:[#allocation3] sm:$0xff]
    %449 = vmatpush.msra.mxu0 %v440
    %450 = vmatpush.msra.mxu0 %v436
    %451 = vmatpush.msra.mxu0 %v432
    %452 = vmatpush.msra.mxu0 %v428
    %453 = vmatpush.msra.mxu0 %v424
    %454 = vmatpush.msra.mxu0 %v420
    %455 = vmatpush.msra.mxu0 %v416
    %456 = vmatpush.msra.mxu0 %v412
    %457 = vmatpush.msra.mxu0 %v408
    %458 = vmatpush.msra.mxu0 %v404
    %459 = vmatpush.msra.mxu0 %v400
    %460 = vmatpush.msra.mxu0 %v396
    %461 = vmatpush.msra.mxu0 %v392
    %462 = vmatpush.msra.mxu0 %v388
    %463 = vmatpush.msra.mxu0 %v384
    %464 = vmatpush.msra.mxu0 %v380
    %465 = vmatmul.f32.gmra.mxu0 %v448
    %v466 = vpop.f32.mrf.mxu0
    %v467 = vadd.f32 0.0, %v466
    %468 = vdwg.mxu0
    %469 = vmatpush.msra.mxu0 %v441
    %470 = vmatpush.msra.mxu0 %v437
    %471 = vmatpush.msra.mxu0 %v433
    %472 = vmatpush.msra.mxu0 %v429
    %473 = vmatpush.msra.mxu0 %v425
    %474 = vmatpush.msra.mxu0 %v421
    %475 = vmatpush.msra.mxu0 %v417
    %476 = vmatpush.msra.mxu0 %v413
    %477 = vmatpush.msra.mxu0 %v409
    %478 = vmatpush.msra.mxu0 %v405
    %479 = vmatpush.msra.mxu0 %v401
    %480 = vmatpush.msra.mxu0 %v397
    %481 = vmatpush.msra.mxu0 %v393
    %482 = vmatpush.msra.mxu0 %v389
    %483 = vmatpush.msra.mxu0 %v385
    %484 = vmatpush.msra.mxu0 %v381
    %485 = vmatmul.f32.gmra.mxu0 %v448
    %v486 = vpop.f32.mrf.mxu0
    %v487 = vadd.f32 0.0, %v486
    %488 = vdwg.mxu0
    %489 = vmatpush.msra.mxu0 %v442
    %490 = vmatpush.msra.mxu0 %v438
    %491 = vmatpush.msra.mxu0 %v434
    %492 = vmatpush.msra.mxu0 %v430
    %493 = vmatpush.msra.mxu0 %v426
    %494 = vmatpush.msra.mxu0 %v422
    %495 = vmatpush.msra.mxu0 %v418
    %496 = vmatpush.msra.mxu0 %v414
    %497 = vmatpush.msra.mxu0 %v410
    %498 = vmatpush.msra.mxu0 %v406
    %499 = vmatpush.msra.mxu0 %v402
    %500 = vmatpush.msra.mxu0 %v398
    %501 = vmatpush.msra.mxu0 %v394
    %502 = vmatpush.msra.mxu0 %v390
    %503 = vmatpush.msra.mxu0 %v386
    %504 = vmatpush.msra.mxu0 %v382
    %505 = vmatmul.f32.gmra.mxu0 %v448
    %v506 = vpop.f32.mrf.mxu0
    %v507 = vadd.f32 0.0, %v506
    %508 = vdwg.mxu0
    %509 = vmatpush.msra.mxu0 %v443
    %510 = vmatpush.msra.mxu0 %v439
    %511 = vmatpush.msra.mxu0 %v435
    %512 = vmatpush.msra.mxu0 %v431
    %513 = vmatpush.msra.mxu0 %v427
    %514 = vmatpush.msra.mxu0 %v423
    %515 = vmatpush.msra.mxu0 %v419
    %516 = vmatpush.msra.mxu0 %v415
    %517 = vmatpush.msra.mxu0 %v411
    %518 = vmatpush.msra.mxu0 %v407
    %519 = vmatpush.msra.mxu0 %v403
    %520 = vmatpush.msra.mxu0 %v399
    %521 = vmatpush.msra.mxu0 %v395
    %522 = vmatpush.msra.mxu0 %v391
    %523 = vmatpush.msra.mxu0 %v387
    %524 = vmatpush.msra.mxu0 %v383
    %525 = vmatmul.f32.gmra.mxu0 %v448
    %v526 = vpop.f32.mrf.mxu0
    %v527 = vadd.f32 0.0, %v526
    %528 = vdwg.mxu0
    %v529 = vadd.f32 %v444, %v467
    %v530 = vadd.f32 %v445, %v487
    %v531 = vadd.f32 %v446, %v507
    %v532 = vadd.f32 %v447, %v527
    %v533 = vxor.u32 %v529, 2147483648
    %v534 = vmul.f32 %v533, 1.442695
    %v535 = vpow.pop %v534
    %v536 = vadd.f32 %v535, 1.0
    %v537 = vrcp.pop %v536
    %v538 = vmul.f32 %v536, %v537
    %v539 = vsub.f32 1.0, %v538
    %v540 = vmul.f32 %v537, %v539
    %v541 = vadd.f32 %v537, %v540
    %vm542 = vweird.f32 %v536
    %vm543 = vweird.f32 %v537
    %vm544 = vmor %vm542, %vm543
    %v545 = vsel %vm544, %v537, %v541
    %v546 = vand.u32 2147483647, %v536
    %vm547 = vcmp.eq.f32.partialorder %v546, 8.507059e+37
    %v548 = vand.u32 %v536, 2147483648
    %v549 = vor.u32 1.1754944e-38, %v548
    %v550 = vsel %vm547, %v549, %v545
    %v551 = vmul.f32 1.0, %v550
    %v552 = vxor.u32 %v530, 2147483648
    %v553 = vmul.f32 %v552, 1.442695
    %v554 = vpow.pop %v553
    %v555 = vadd.f32 %v554, 1.0
    %v556 = vrcp.pop %v555
    %v557 = vmul.f32 %v555, %v556
    %v558 = vsub.f32 1.0, %v557
    %v559 = vmul.f32 %v556, %v558
    %v560 = vadd.f32 %v556, %v559
    %vm561 = vweird.f32 %v555
    %vm562 = vweird.f32 %v556
    %vm563 = vmor %vm561, %vm562
    %v564 = vsel %vm563, %v556, %v560
    %v565 = vand.u32 2147483647, %v555
    %vm566 = vcmp.eq.f32.partialorder %v565, 8.507059e+37
    %v567 = vand.u32 %v555, 2147483648
    %v568 = vor.u32 1.1754944e-38, %v567
    %v569 = vsel %vm566, %v568, %v564
    %v570 = vmul.f32 1.0, %v569
    %v571 = vtanh.pop %v531
    %v572 = vxor.u32 %v532, 2147483648
    %v573 = vmul.f32 %v572, 1.442695
    %v574 = vpow.pop %v573
    %v575 = vadd.f32 %v574, 1.0
    %v576 = vrcp.pop %v575
    %v577 = vmul.f32 %v575, %v576
    %v578 = vsub.f32 1.0, %v577
    %v579 = vmul.f32 %v576, %v578
    %v580 = vadd.f32 %v576, %v579
    %vm581 = vweird.f32 %v575
    %vm582 = vweird.f32 %v576
    %vm583 = vmor %vm581, %vm582
    %v584 = vsel %vm583, %v576, %v580
    %v585 = vand.u32 2147483647, %v575
    %vm586 = vcmp.eq.f32.partialorder %v585, 8.507059e+37
    %v587 = vand.u32 %v575, 2147483648
    %v588 = vor.u32 1.1754944e-38, %v587
    %v589 = vsel %vm586, %v588, %v584
    %v590 = vmul.f32 1.0, %v589
    %v591 = vld [vmem:[#allocation4] sm:$0xff]
    %v592 = vmul.f32 %v570, %v591
    %v593 = vmul.f32 %v551, %v571
    %v594 = vadd.f32 %v592, %v593
    %v595 = vtanh.pop %v594
    %v596 = vmul.f32 %v590, %v595
    %597 = vst [vmem:[#allocation4] sm:$0xff] %v594
    %598 = vst [vmem:[#allocation3] sm:$0xff] %v596
    %s599 = scalar_lea.vmem [#allocation2], 32
    %v600 = vld [vmem:[%s599] sm:$0xff]
    %v601 = vld [vmem:[%s599 + $0x8] sm:$0xff]
    %v602 = vld [vmem:[%s599 + $0x10] sm:$0xff]
    %v603 = vld [vmem:[%s599 + $0x18] sm:$0xff]
    %v604 = vld [vmem:[#allocation3] sm:$0xff]
    %605 = vmatpush.msra.mxu0 %v440
    %606 = vmatpush.msra.mxu0 %v436
    %607 = vmatpush.msra.mxu0 %v432
    %608 = vmatpush.msra.mxu0 %v428
    %609 = vmatpush.msra.mxu0 %v424
    %610 = vmatpush.msra.mxu0 %v420
    %611 = vmatpush.msra.mxu0 %v416
    %612 = vmatpush.msra.mxu0 %v412
    %613 = vmatpush.msra.mxu0 %v408
    %614 = vmatpush.msra.mxu0 %v404
    %615 = vmatpush.msra.mxu0 %v400
    %616 = vmatpush.msra.mxu0 %v396
    %617 = vmatpush.msra.mxu0 %v392
    %618 = vmatpush.msra.mxu0 %v388
    %619 = vmatpush.msra.mxu0 %v384
    %620 = vmatpush.msra.mxu0 %v380
    %621 = vmatmul.f32.gmra.mxu0 %v604
    %v622 = vpop.f32.mrf.mxu0
    %v623 = vadd.f32 0.0, %v622
    %624 = vdwg.mxu0
    %625 = vmatpush.msra.mxu0 %v441
    %626 = vmatpush.msra.mxu0 %v437
    %627 = vmatpush.msra.mxu0 %v433
    %628 = vmatpush.msra.mxu0 %v429
    %629 = vmatpush.msra.mxu0 %v425
    %630 = vmatpush.msra.mxu0 %v421
    %631 = vmatpush.msra.mxu0 %v417
    %632 = vmatpush.msra.mxu0 %v413
    %633 = vmatpush.msra.mxu0 %v409
    %634 = vmatpush.msra.mxu0 %v405
    %635 = vmatpush.msra.mxu0 %v401
    %636 = vmatpush.msra.mxu0 %v397
    %637 = vmatpush.msra.mxu0 %v393
    %638 = vmatpush.msra.mxu0 %v389
    %639 = vmatpush.msra.mxu0 %v385
    %640 = vmatpush.msra.mxu0 %v381
    %641 = vmatmul.f32.gmra.mxu0 %v604
    %v642 = vpop.f32.mrf.mxu0
    %v643 = vadd.f32 0.0, %v642
    %644 = vdwg.mxu0
    %645 = vmatpush.msra.mxu0 %v442
    %646 = vmatpush.msra.mxu0 %v438
    %647 = vmatpush.msra.mxu0 %v434
    %648 = vmatpush.msra.mxu0 %v430
    %649 = vmatpush.msra.mxu0 %v426
    %650 = vmatpush.msra.mxu0 %v422
    %651 = vmatpush.msra.mxu0 %v418
    %652 = vmatpush.msra.mxu0 %v414
    %653 = vmatpush.msra.mxu0 %v410
    %654 = vmatpush.msra.mxu0 %v406
    %655 = vmatpush.msra.mxu0 %v402
    %656 = vmatpush.msra.mxu0 %v398
    %657 = vmatpush.msra.mxu0 %v394
    %658 = vmatpush.msra.mxu0 %v390
    %659 = vmatpush.msra.mxu0 %v386
    %660 = vmatpush.msra.mxu0 %v382
    %661 = vmatmul.f32.gmra.mxu0 %v604
    %v662 = vpop.f32.mrf.mxu0
    %v663 = vadd.f32 0.0, %v662
    %664 = vdwg.mxu0
    %665 = vmatpush.msra.mxu0 %v443
    %666 = vmatpush.msra.mxu0 %v439
    %667 = vmatpush.msra.mxu0 %v435
    %668 = vmatpush.msra.mxu0 %v431
    %669 = vmatpush.msra.mxu0 %v427
    %670 = vmatpush.msra.mxu0 %v423
    %671 = vmatpush.msra.mxu0 %v419
    %672 = vmatpush.msra.mxu0 %v415
    %673 = vmatpush.msra.mxu0 %v411
    %674 = vmatpush.msra.mxu0 %v407
    %675 = vmatpush.msra.mxu0 %v403
    %676 = vmatpush.msra.mxu0 %v399
    %677 = vmatpush.msra.mxu0 %v395
    %678 = vmatpush.msra.mxu0 %v391
    %679 = vmatpush.msra.mxu0 %v387
    %680 = vmatpush.msra.mxu0 %v383
    %681 = vmatmul.f32.gmra.mxu0 %v604
    %v682 = vpop.f32.mrf.mxu0
    %v683 = vadd.f32 0.0, %v682
    %684 = vdwg.mxu0
    %v685 = vadd.f32 %v600, %v623
    %v686 = vadd.f32 %v601, %v643
    %v687 = vadd.f32 %v602, %v663
    %v688 = vadd.f32 %v603, %v683
    %v689 = vxor.u32 %v685, 2147483648
    %v690 = vmul.f32 %v689, 1.442695
    %v691 = vpow.pop %v690
    %v692 = vadd.f32 %v691, 1.0
    %v693 = vrcp.pop %v692
    %v694 = vmul.f32 %v692, %v693
    %v695 = vsub.f32 1.0, %v694
    %v696 = vmul.f32 %v693, %v695
    %v697 = vadd.f32 %v693, %v696
    %vm698 = vweird.f32 %v692
    %vm699 = vweird.f32 %v693
    %vm700 = vmor %vm698, %vm699
    %v701 = vsel %vm700, %v693, %v697
    %v702 = vand.u32 2147483647, %v692
    %vm703 = vcmp.eq.f32.partialorder %v702, 8.507059e+37
    %v704 = vand.u32 %v692, 2147483648
    %v705 = vor.u32 1.1754944e-38, %v704
    %v706 = vsel %vm703, %v705, %v701
    %v707 = vmul.f32 1.0, %v706
    %v708 = vxor.u32 %v686, 2147483648
    %v709 = vmul.f32 %v708, 1.442695
    %v710 = vpow.pop %v709
    %v711 = vadd.f32 %v710, 1.0
    %v712 = vrcp.pop %v711
    %v713 = vmul.f32 %v711, %v712
    %v714 = vsub.f32 1.0, %v713
    %v715 = vmul.f32 %v712, %v714
    %v716 = vadd.f32 %v712, %v715
    %vm717 = vweird.f32 %v711
    %vm718 = vweird.f32 %v712
    %vm719 = vmor %vm717, %vm718
    %v720 = vsel %vm719, %v712, %v716
    %v721 = vand.u32 2147483647, %v711
    %vm722 = vcmp.eq.f32.partialorder %v721, 8.507059e+37
    %v723 = vand.u32 %v711, 2147483648
    %v724 = vor.u32 1.1754944e-38, %v723
    %v725 = vsel %vm722, %v724, %v720
    %v726 = vmul.f32 1.0, %v725
    %v727 = vtanh.pop %v687
    %v728 = vxor.u32 %v688, 2147483648
    %v729 = vmul.f32 %v728, 1.442695
    %v730 = vpow.pop %v729
    %v731 = vadd.f32 %v730, 1.0
    %v732 = vrcp.pop %v731
    %v733 = vmul.f32 %v731, %v732
    %v734 = vsub.f32 1.0, %v733
    %v735 = vmul.f32 %v732, %v734
    %v736 = vadd.f32 %v732, %v735
    %vm737 = vweird.f32 %v731
    %vm738 = vweird.f32 %v732
    %vm739 = vmor %vm737, %vm738
    %v740 = vsel %vm739, %v732, %v736
    %v741 = vand.u32 2147483647, %v731
    %vm742 = vcmp.eq.f32.partialorder %v741, 8.507059e+37
    %v743 = vand.u32 %v731, 2147483648
    %v744 = vor.u32 1.1754944e-38, %v743
    %v745 = vsel %vm742, %v744, %v740
    %v746 = vmul.f32 1.0, %v745
    %v747 = vld [vmem:[#allocation4] sm:$0xff]
    %v748 = vmul.f32 %v726, %v747
    %v749 = vmul.f32 %v707, %v727
    %v750 = vadd.f32 %v748, %v749
    %v751 = vtanh.pop %v750
    %v752 = vmul.f32 %v746, %v751
    %753 = vst [vmem:[#allocation4] sm:$0xff] %v750
    %754 = vst [vmem:[#allocation3] sm:$0xff] %v752
    %s755 = scalar_lea.vmem [#allocation2], 64
    %v756 = vld [vmem:[%s755] sm:$0xff]
    %v757 = vld [vmem:[%s755 + $0x8] sm:$0xff]
    %v758 = vld [vmem:[%s755 + $0x10] sm:$0xff]
    %v759 = vld [vmem:[%s755 + $0x18] sm:$0xff]
    %v760 = vld [vmem:[#allocation3] sm:$0xff]
    %761 = vmatpush.msra.mxu0 %v440
    %762 = vmatpush.msra.mxu0 %v436
    %763 = vmatpush.msra.mxu0 %v432
    %764 = vmatpush.msra.mxu0 %v428
    %765 = vmatpush.msra.mxu0 %v424
    %766 = vmatpush.msra.mxu0 %v420
    %767 = vmatpush.msra.mxu0 %v416
    %768 = vmatpush.msra.mxu0 %v412
    %769 = vmatpush.msra.mxu0 %v408
    %770 = vmatpush.msra.mxu0 %v404
    %771 = vmatpush.msra.mxu0 %v400
    %772 = vmatpush.msra.mxu0 %v396
    %773 = vmatpush.msra.mxu0 %v392
    %774 = vmatpush.msra.mxu0 %v388
    %775 = vmatpush.msra.mxu0 %v384
    %776 = vmatpush.msra.mxu0 %v380
    %777 = vmatmul.f32.gmra.mxu0 %v760
    %v778 = vpop.f32.mrf.mxu0
    %v779 = vadd.f32 0.0, %v778
    %780 = vdwg.mxu0
    %781 = vmatpush.msra.mxu0 %v441
    %782 = vmatpush.msra.mxu0 %v437
    %783 = vmatpush.msra.mxu0 %v433
    %784 = vmatpush.msra.mxu0 %v429
    %785 = vmatpush.msra.mxu0 %v425
    %786 = vmatpush.msra.mxu0 %v421
    %787 = vmatpush.msra.mxu0 %v417
    %788 = vmatpush.msra.mxu0 %v413
    %789 = vmatpush.msra.mxu0 %v409
    %790 = vmatpush.msra.mxu0 %v405
    %791 = vmatpush.msra.mxu0 %v401
    %792 = vmatpush.msra.mxu0 %v397
    %793 = vmatpush.msra.mxu0 %v393
    %794 = vmatpush.msra.mxu0 %v389
    %795 = vmatpush.msra.mxu0 %v385
    %796 = vmatpush.msra.mxu0 %v381
    %797 = vmatmul.f32.gmra.mxu0 %v760
    %v798 = vpop.f32.mrf.mxu0
    %v799 = vadd.f32 0.0, %v798
    %800 = vdwg.mxu0
    %801 = vmatpush.msra.mxu0 %v442
    %802 = vmatpush.msra.mxu0 %v438
    %803 = vmatpush.msra.mxu0 %v434
    %804 = vmatpush.msra.mxu0 %v430
    %805 = vmatpush.msra.mxu0 %v426
    %806 = vmatpush.msra.mxu0 %v422
    %807 = vmatpush.msra.mxu0 %v418
    %808 = vmatpush.msra.mxu0 %v414
    %809 = vmatpush.msra.mxu0 %v410
    %810 = vmatpush.msra.mxu0 %v406
    %811 = vmatpush.msra.mxu0 %v402
    %812 = vmatpush.msra.mxu0 %v398
    %813 = vmatpush.msra.mxu0 %v394
    %814 = vmatpush.msra.mxu0 %v390
    %815 = vmatpush.msra.mxu0 %v386
    %816 = vmatpush.msra.mxu0 %v382
    %817 = vmatmul.f32.gmra.mxu0 %v760
    %v818 = vpop.f32.mrf.mxu0
    %v819 = vadd.f32 0.0, %v818
    %820 = vdwg.mxu0
    %821 = vmatpush.msra.mxu0 %v443
    %822 = vmatpush.msra.mxu0 %v439
    %823 = vmatpush.msra.mxu0 %v435
    %824 = vmatpush.msra.mxu0 %v431
    %825 = vmatpush.msra.mxu0 %v427
    %826 = vmatpush.msra.mxu0 %v423
    %827 = vmatpush.msra.mxu0 %v419
    %828 = vmatpush.msra.mxu0 %v415
    %829 = vmatpush.msra.mxu0 %v411
    %830 = vmatpush.msra.mxu0 %v407
    %831 = vmatpush.msra.mxu0 %v403
    %832 = vmatpush.msra.mxu0 %v399
    %833 = vmatpush.msra.mxu0 %v395
    %834 = vmatpush.msra.mxu0 %v391
    %835 = vmatpush.msra.mxu0 %v387
    %836 = vmatpush.msra.mxu0 %v383
    %837 = vmatmul.f32.gmra.mxu0 %v760
    %v838 = vpop.f32.mrf.mxu0
    %v839 = vadd.f32 0.0, %v838
    %840 = vdwg.mxu0
    %v841 = vadd.f32 %v756, %v779
    %v842 = vadd.f32 %v757, %v799
    %v843 = vadd.f32 %v758, %v819
    %v844 = vadd.f32 %v759, %v839
    %v845 = vxor.u32 %v841, 2147483648
    %v846 = vmul.f32 %v845, 1.442695
    %v847 = vpow.pop %v846
    %v848 = vadd.f32 %v847, 1.0
    %v849 = vrcp.pop %v848
    %v850 = vmul.f32 %v848, %v849
    %v851 = vsub.f32 1.0, %v850
    %v852 = vmul.f32 %v849, %v851
    %v853 = vadd.f32 %v849, %v852
    %vm854 = vweird.f32 %v848
    %vm855 = vweird.f32 %v849
    %vm856 = vmor %vm854, %vm855
    %v857 = vsel %vm856, %v849, %v853
    %v858 = vand.u32 2147483647, %v848
    %vm859 = vcmp.eq.f32.partialorder %v858, 8.507059e+37
    %v860 = vand.u32 %v848, 2147483648
    %v861 = vor.u32 1.1754944e-38, %v860
    %v862 = vsel %vm859, %v861, %v857
    %v863 = vmul.f32 1.0, %v862
    %v864 = vxor.u32 %v842, 2147483648
    %v865 = vmul.f32 %v864, 1.442695
    %v866 = vpow.pop %v865
    %v867 = vadd.f32 %v866, 1.0
    %v868 = vrcp.pop %v867
    %v869 = vmul.f32 %v867, %v868
    %v870 = vsub.f32 1.0, %v869
    %v871 = vmul.f32 %v868, %v870
    %v872 = vadd.f32 %v868, %v871
    %vm873 = vweird.f32 %v867
    %vm874 = vweird.f32 %v868
    %vm875 = vmor %vm873, %vm874
    %v876 = vsel %vm875, %v868, %v872
    %v877 = vand.u32 2147483647, %v867
    %vm878 = vcmp.eq.f32.partialorder %v877, 8.507059e+37
    %v879 = vand.u32 %v867, 2147483648
    %v880 = vor.u32 1.1754944e-38, %v879
    %v881 = vsel %vm878, %v880, %v876
    %v882 = vmul.f32 1.0, %v881
    %v883 = vtanh.pop %v843
    %v884 = vxor.u32 %v844, 2147483648
    %v885 = vmul.f32 %v884, 1.442695
    %v886 = vpow.pop %v885
    %v887 = vadd.f32 %v886, 1.0
    %v888 = vrcp.pop %v887
    %v889 = vmul.f32 %v887, %v888
    %v890 = vsub.f32 1.0, %v889
    %v891 = vmul.f32 %v888, %v890
    %v892 = vadd.f32 %v888, %v891
    %vm893 = vweird.f32 %v887
    %vm894 = vweird.f32 %v888
    %vm895 = vmor %vm893, %vm894
    %v896 = vsel %vm895, %v888, %v892
    %v897 = vand.u32 2147483647, %v887
    %vm898 = vcmp.eq.f32.partialorder %v897, 8.507059e+37
    %v899 = vand.u32 %v887, 2147483648
    %v900 = vor.u32 1.1754944e-38, %v899
    %v901 = vsel %vm898, %v900, %v896
    %v902 = vmul.f32 1.0, %v901
    %v903 = vld [vmem:[#allocation4] sm:$0xff]
    %v904 = vmul.f32 %v882, %v903
    %v905 = vmul.f32 %v863, %v883
    %v906 = vadd.f32 %v904, %v905
    %v907 = vtanh.pop %v906
    %v908 = vmul.f32 %v902, %v907
    %909 = vst [vmem:[#allocation4] sm:$0xff] %v906
    %910 = vst [vmem:[#allocation3] sm:$0xff] %v908
    %s911 = scalar_lea.vmem [#allocation2], 96
    %v912 = vld [vmem:[%s911] sm:$0xff]
    %v913 = vld [vmem:[%s911 + $0x8] sm:$0xff]
    %v914 = vld [vmem:[%s911 + $0x10] sm:$0xff]
    %v915 = vld [vmem:[%s911 + $0x18] sm:$0xff]
    %v916 = vld [vmem:[#allocation3] sm:$0xff]
    %917 = vmatpush.msra.mxu0 %v440
    %918 = vmatpush.msra.mxu0 %v436
    %919 = vmatpush.msra.mxu0 %v432
    %920 = vmatpush.msra.mxu0 %v428
    %921 = vmatpush.msra.mxu0 %v424
    %922 = vmatpush.msra.mxu0 %v420
    %923 = vmatpush.msra.mxu0 %v416
    %924 = vmatpush.msra.mxu0 %v412
    %925 = vmatpush.msra.mxu0 %v408
    %926 = vmatpush.msra.mxu0 %v404
    %927 = vmatpush.msra.mxu0 %v400
    %928 = vmatpush.msra.mxu0 %v396
    %929 = vmatpush.msra.mxu0 %v392
    %930 = vmatpush.msra.mxu0 %v388
    %931 = vmatpush.msra.mxu0 %v384
    %932 = vmatpush.msra.mxu0 %v380
    %933 = vmatmul.f32.gmra.mxu0 %v916
    %v934 = vpop.f32.mrf.mxu0
    %v935 = vadd.f32 0.0, %v934
    %936 = vdwg.mxu0
    %937 = vmatpush.msra.mxu0 %v441
    %938 = vmatpush.msra.mxu0 %v437
    %939 = vmatpush.msra.mxu0 %v433
    %940 = vmatpush.msra.mxu0 %v429
    %941 = vmatpush.msra.mxu0 %v425
    %942 = vmatpush.msra.mxu0 %v421
    %943 = vmatpush.msra.mxu0 %v417
    %944 = vmatpush.msra.mxu0 %v413
    %945 = vmatpush.msra.mxu0 %v409
    %946 = vmatpush.msra.mxu0 %v405
    %947 = vmatpush.msra.mxu0 %v401
    %948 = vmatpush.msra.mxu0 %v397
    %949 = vmatpush.msra.mxu0 %v393
    %950 = vmatpush.msra.mxu0 %v389
    %951 = vmatpush.msra.mxu0 %v385
    %952 = vmatpush.msra.mxu0 %v381
    %953 = vmatmul.f32.gmra.mxu0 %v916
    %v954 = vpop.f32.mrf.mxu0
    %v955 = vadd.f32 0.0, %v954
    %956 = vdwg.mxu0
    %957 = vmatpush.msra.mxu0 %v442
    %958 = vmatpush.msra.mxu0 %v438
    %959 = vmatpush.msra.mxu0 %v434
    %960 = vmatpush.msra.mxu0 %v430
    %961 = vmatpush.msra.mxu0 %v426
    %962 = vmatpush.msra.mxu0 %v422
    %963 = vmatpush.msra.mxu0 %v418
    %964 = vmatpush.msra.mxu0 %v414
    %965 = vmatpush.msra.mxu0 %v410
    %966 = vmatpush.msra.mxu0 %v406
    %967 = vmatpush.msra.mxu0 %v402
    %968 = vmatpush.msra.mxu0 %v398
    %969 = vmatpush.msra.mxu0 %v394
    %970 = vmatpush.msra.mxu0 %v390
    %971 = vmatpush.msra.mxu0 %v386
    %972 = vmatpush.msra.mxu0 %v382
    %973 = vmatmul.f32.gmra.mxu0 %v916
    %v974 = vpop.f32.mrf.mxu0
    %v975 = vadd.f32 0.0, %v974
    %976 = vdwg.mxu0
    %977 = vmatpush.msra.mxu0 %v443
    %978 = vmatpush.msra.mxu0 %v439
    %979 = vmatpush.msra.mxu0 %v435
    %980 = vmatpush.msra.mxu0 %v431
    %981 = vmatpush.msra.mxu0 %v427
    %982 = vmatpush.msra.mxu0 %v423
    %983 = vmatpush.msra.mxu0 %v419
    %984 = vmatpush.msra.mxu0 %v415
    %985 = vmatpush.msra.mxu0 %v411
    %986 = vmatpush.msra.mxu0 %v407
    %987 = vmatpush.msra.mxu0 %v403
    %988 = vmatpush.msra.mxu0 %v399
    %989 = vmatpush.msra.mxu0 %v395
    %990 = vmatpush.msra.mxu0 %v391
    %991 = vmatpush.msra.mxu0 %v387
    %992 = vmatpush.msra.mxu0 %v383
    %993 = vmatmul.f32.gmra.mxu0 %v916
    %v994 = vpop.f32.mrf.mxu0
    %v995 = vadd.f32 0.0, %v994
    %996 = vdwg.mxu0
    %v997 = vadd.f32 %v912, %v935
    %v998 = vadd.f32 %v913, %v955
    %v999 = vadd.f32 %v914, %v975
    %v1000 = vadd.f32 %v915, %v995
    %v1001 = vxor.u32 %v997, 2147483648
    %v1002 = vmul.f32 %v1001, 1.442695
    %v1003 = vpow.pop %v1002
    %v1004 = vadd.f32 %v1003, 1.0
    %v1005 = vrcp.pop %v1004
    %v1006 = vmul.f32 %v1004, %v1005
    %v1007 = vsub.f32 1.0, %v1006
    %v1008 = vmul.f32 %v1005, %v1007
    %v1009 = vadd.f32 %v1005, %v1008
    %vm1010 = vweird.f32 %v1004
    %vm1011 = vweird.f32 %v1005
    %vm1012 = vmor %vm1010, %vm1011
    %v1013 = vsel %vm1012, %v1005, %v1009
    %v1014 = vand.u32 2147483647, %v1004
    %vm1015 = vcmp.eq.f32.partialorder %v1014, 8.507059e+37
    %v1016 = vand.u32 %v1004, 2147483648
    %v1017 = vor.u32 1.1754944e-38, %v1016
    %v1018 = vsel %vm1015, %v1017, %v1013
    %v1019 = vmul.f32 1.0, %v1018
    %v1020 = vxor.u32 %v998, 2147483648
    %v1021 = vmul.f32 %v1020, 1.442695
    %v1022 = vpow.pop %v1021
    %v1023 = vadd.f32 %v1022, 1.0
    %v1024 = vrcp.pop %v1023
    %v1025 = vmul.f32 %v1023, %v1024
    %v1026 = vsub.f32 1.0, %v1025
    %v1027 = vmul.f32 %v1024, %v1026
    %v1028 = vadd.f32 %v1024, %v1027
    %vm1029 = vweird.f32 %v1023
    %vm1030 = vweird.f32 %v1024
    %vm1031 = vmor %vm1029, %vm1030
    %v1032 = vsel %vm1031, %v1024, %v1028
    %v1033 = vand.u32 2147483647, %v1023
    %vm1034 = vcmp.eq.f32.partialorder %v1033, 8.507059e+37
    %v1035 = vand.u32 %v1023, 2147483648
    %v1036 = vor.u32 1.1754944e-38, %v1035
    %v1037 = vsel %vm1034, %v1036, %v1032
    %v1038 = vmul.f32 1.0, %v1037
    %v1039 = vtanh.pop %v999
    %v1040 = vxor.u32 %v1000, 2147483648
    %v1041 = vmul.f32 %v1040, 1.442695
    %v1042 = vpow.pop %v1041
    %v1043 = vadd.f32 %v1042, 1.0
    %v1044 = vrcp.pop %v1043
    %v1045 = vmul.f32 %v1043, %v1044
    %v1046 = vsub.f32 1.0, %v1045
    %v1047 = vmul.f32 %v1044, %v1046
    %v1048 = vadd.f32 %v1044, %v1047
    %vm1049 = vweird.f32 %v1043
    %vm1050 = vweird.f32 %v1044
    %vm1051 = vmor %vm1049, %vm1050
    %v1052 = vsel %vm1051, %v1044, %v1048
    %v1053 = vand.u32 2147483647, %v1043
    %vm1054 = vcmp.eq.f32.partialorder %v1053, 8.507059e+37
    %v1055 = vand.u32 %v1043, 2147483648
    %v1056 = vor.u32 1.1754944e-38, %v1055
    %v1057 = vsel %vm1054, %v1056, %v1052
    %v1058 = vmul.f32 1.0, %v1057
    %v1059 = vld [vmem:[#allocation4] sm:$0xff]
    %v1060 = vmul.f32 %v1038, %v1059
    %v1061 = vmul.f32 %v1019, %v1039
    %v1062 = vadd.f32 %v1060, %v1061
    %v1063 = vtanh.pop %v1062
    %v1064 = vmul.f32 %v1058, %v1063
    %1065 = vst [vmem:[#allocation4] sm:$0xff] %v1062
    %1066 = vst [vmem:[#allocation3] sm:$0xff] %v1064
    %s1067 = scalar_lea.vmem [#allocation2], 128
    %v1068 = vld [vmem:[%s1067] sm:$0xff]
    %v1069 = vld [vmem:[%s1067 + $0x8] sm:$0xff]
    %v1070 = vld [vmem:[%s1067 + $0x10] sm:$0xff]
    %v1071 = vld [vmem:[%s1067 + $0x18] sm:$0xff]
    %v1072 = vld [vmem:[#allocation3] sm:$0xff]
    %1073 = vmatpush.msra.mxu0 %v440
    %1074 = vmatpush.msra.mxu0 %v436
    %1075 = vmatpush.msra.mxu0 %v432
    %1076 = vmatpush.msra.mxu0 %v428
    %1077 = vmatpush.msra.mxu0 %v424
    %1078 = vmatpush.msra.mxu0 %v420
    %1079 = vmatpush.msra.mxu0 %v416
    %1080 = vmatpush.msra.mxu0 %v412
    %1081 = vmatpush.msra.mxu0 %v408
    %1082 = vmatpush.msra.mxu0 %v404
    %1083 = vmatpush.msra.mxu0 %v400
    %1084 = vmatpush.msra.mxu0 %v396
    %1085 = vmatpush.msra.mxu0 %v392
    %1086 = vmatpush.msra.mxu0 %v388
    %1087 = vmatpush.msra.mxu0 %v384
    %1088 = vmatpush.msra.mxu0 %v380
    %1089 = vmatmul.f32.gmra.mxu0 %v1072
    %v1090 = vpop.f32.mrf.mxu0
    %v1091 = vadd.f32 0.0, %v1090
    %1092 = vdwg.mxu0
    %1093 = vmatpush.msra.mxu0 %v441
    %1094 = vmatpush.msra.mxu0 %v437
    %1095 = vmatpush.msra.mxu0 %v433
    %1096 = vmatpush.msra.mxu0 %v429
    %1097 = vmatpush.msra.mxu0 %v425
    %1098 = vmatpush.msra.mxu0 %v421
    %1099 = vmatpush.msra.mxu0 %v417
    %1100 = vmatpush.msra.mxu0 %v413
    %1101 = vmatpush.msra.mxu0 %v409
    %1102 = vmatpush.msra.mxu0 %v405
    %1103 = vmatpush.msra.mxu0 %v401
    %1104 = vmatpush.msra.mxu0 %v397
    %1105 = vmatpush.msra.mxu0 %v393
    %1106 = vmatpush.msra.mxu0 %v389
    %1107 = vmatpush.msra.mxu0 %v385
    %1108 = vmatpush.msra.mxu0 %v381
    %1109 = vmatmul.f32.gmra.mxu0 %v1072
    %v1110 = vpop.f32.mrf.mxu0
    %v1111 = vadd.f32 0.0, %v1110
    %1112 = vdwg.mxu0
    %1113 = vmatpush.msra.mxu0 %v442
    %1114 = vmatpush.msra.mxu0 %v438
    %1115 = vmatpush.msra.mxu0 %v434
    %1116 = vmatpush.msra.mxu0 %v430
    %1117 = vmatpush.msra.mxu0 %v426
    %1118 = vmatpush.msra.mxu0 %v422
    %1119 = vmatpush.msra.mxu0 %v418
    %1120 = vmatpush.msra.mxu0 %v414
    %1121 = vmatpush.msra.mxu0 %v410
    %1122 = vmatpush.msra.mxu0 %v406
    %1123 = vmatpush.msra.mxu0 %v402
    %1124 = vmatpush.msra.mxu0 %v398
    %1125 = vmatpush.msra.mxu0 %v394
    %1126 = vmatpush.msra.mxu0 %v390
    %1127 = vmatpush.msra.mxu0 %v386
    %1128 = vmatpush.msra.mxu0 %v382
    %1129 = vmatmul.f32.gmra.mxu0 %v1072
    %v1130 = vpop.f32.mrf.mxu0
    %v1131 = vadd.f32 0.0, %v1130
    %1132 = vdwg.mxu0
    %1133 = vmatpush.msra.mxu0 %v443
    %1134 = vmatpush.msra.mxu0 %v439
    %1135 = vmatpush.msra.mxu0 %v435
    %1136 = vmatpush.msra.mxu0 %v431
    %1137 = vmatpush.msra.mxu0 %v427
    %1138 = vmatpush.msra.mxu0 %v423
    %1139 = vmatpush.msra.mxu0 %v419
    %1140 = vmatpush.msra.mxu0 %v415
    %1141 = vmatpush.msra.mxu0 %v411
    %1142 = vmatpush.msra.mxu0 %v407
    %1143 = vmatpush.msra.mxu0 %v403
    %1144 = vmatpush.msra.mxu0 %v399
    %1145 = vmatpush.msra.mxu0 %v395
    %1146 = vmatpush.msra.mxu0 %v391
    %1147 = vmatpush.msra.mxu0 %v387
    %1148 = vmatpush.msra.mxu0 %v383
    %1149 = vmatmul.f32.gmra.mxu0 %v1072
    %v1150 = vpop.f32.mrf.mxu0
    %v1151 = vadd.f32 0.0, %v1150
    %1152 = vdwg.mxu0
    %v1153 = vadd.f32 %v1068, %v1091
    %v1154 = vadd.f32 %v1069, %v1111
    %v1155 = vadd.f32 %v1070, %v1131
    %v1156 = vadd.f32 %v1071, %v1151
    %v1157 = vxor.u32 %v1153, 2147483648
    %v1158 = vmul.f32 %v1157, 1.442695
    %v1159 = vpow.pop %v1158
    %v1160 = vadd.f32 %v1159, 1.0
    %v1161 = vrcp.pop %v1160
    %v1162 = vmul.f32 %v1160, %v1161
    %v1163 = vsub.f32 1.0, %v1162
    %v1164 = vmul.f32 %v1161, %v1163
    %v1165 = vadd.f32 %v1161, %v1164
    %vm1166 = vweird.f32 %v1160
    %vm1167 = vweird.f32 %v1161
    %vm1168 = vmor %vm1166, %vm1167
    %v1169 = vsel %vm1168, %v1161, %v1165
    %v1170 = vand.u32 2147483647, %v1160
    %vm1171 = vcmp.eq.f32.partialorder %v1170, 8.507059e+37
    %v1172 = vand.u32 %v1160, 2147483648
    %v1173 = vor.u32 1.1754944e-38, %v1172
    %v1174 = vsel %vm1171, %v1173, %v1169
    %v1175 = vmul.f32 1.0, %v1174
    %v1176 = vxor.u32 %v1154, 2147483648
    %v1177 = vmul.f32 %v1176, 1.442695
    %v1178 = vpow.pop %v1177
    %v1179 = vadd.f32 %v1178, 1.0
    %v1180 = vrcp.pop %v1179
    %v1181 = vmul.f32 %v1179, %v1180
    %v1182 = vsub.f32 1.0, %v1181
    %v1183 = vmul.f32 %v1180, %v1182
    %v1184 = vadd.f32 %v1180, %v1183
    %vm1185 = vweird.f32 %v1179
    %vm1186 = vweird.f32 %v1180
    %vm1187 = vmor %vm1185, %vm1186
    %v1188 = vsel %vm1187, %v1180, %v1184
    %v1189 = vand.u32 2147483647, %v1179
    %vm1190 = vcmp.eq.f32.partialorder %v1189, 8.507059e+37
    %v1191 = vand.u32 %v1179, 2147483648
    %v1192 = vor.u32 1.1754944e-38, %v1191
    %v1193 = vsel %vm1190, %v1192, %v1188
    %v1194 = vmul.f32 1.0, %v1193
    %v1195 = vtanh.pop %v1155
    %v1196 = vxor.u32 %v1156, 2147483648
    %v1197 = vmul.f32 %v1196, 1.442695
    %v1198 = vpow.pop %v1197
    %v1199 = vadd.f32 %v1198, 1.0
    %v1200 = vrcp.pop %v1199
    %v1201 = vmul.f32 %v1199, %v1200
    %v1202 = vsub.f32 1.0, %v1201
    %v1203 = vmul.f32 %v1200, %v1202
    %v1204 = vadd.f32 %v1200, %v1203
    %vm1205 = vweird.f32 %v1199
    %vm1206 = vweird.f32 %v1200
    %vm1207 = vmor %vm1205, %vm1206
    %v1208 = vsel %vm1207, %v1200, %v1204
    %v1209 = vand.u32 2147483647, %v1199
    %vm1210 = vcmp.eq.f32.partialorder %v1209, 8.507059e+37
    %v1211 = vand.u32 %v1199, 2147483648
    %v1212 = vor.u32 1.1754944e-38, %v1211
    %v1213 = vsel %vm1210, %v1212, %v1208
    %v1214 = vmul.f32 1.0, %v1213
    %v1215 = vld [vmem:[#allocation4] sm:$0xff]
    %v1216 = vmul.f32 %v1194, %v1215
    %v1217 = vmul.f32 %v1175, %v1195
    %v1218 = vadd.f32 %v1216, %v1217
    %v1219 = vtanh.pop %v1218
    %v1220 = vmul.f32 %v1214, %v1219
    %1221 = vst [vmem:[#allocation4] sm:$0xff] %v1218
    %1222 = vst [vmem:[#allocation3] sm:$0xff] %v1220
    %s1223 = scalar_lea.vmem [#allocation2], 160
    %v1224 = vld [vmem:[%s1223] sm:$0xff]
    %v1225 = vld [vmem:[%s1223 + $0x8] sm:$0xff]
    %v1226 = vld [vmem:[%s1223 + $0x10] sm:$0xff]
    %v1227 = vld [vmem:[%s1223 + $0x18] sm:$0xff]
    %v1228 = vld [vmem:[#allocation3] sm:$0xff]
    %1229 = vmatpush.msra.mxu0 %v440
    %1230 = vmatpush.msra.mxu0 %v436
    %1231 = vmatpush.msra.mxu0 %v432
    %1232 = vmatpush.msra.mxu0 %v428
    %1233 = vmatpush.msra.mxu0 %v424
    %1234 = vmatpush.msra.mxu0 %v420
    %1235 = vmatpush.msra.mxu0 %v416
    %1236 = vmatpush.msra.mxu0 %v412
    %1237 = vmatpush.msra.mxu0 %v408
    %1238 = vmatpush.msra.mxu0 %v404
    %1239 = vmatpush.msra.mxu0 %v400
    %1240 = vmatpush.msra.mxu0 %v396
    %1241 = vmatpush.msra.mxu0 %v392
    %1242 = vmatpush.msra.mxu0 %v388
    %1243 = vmatpush.msra.mxu0 %v384
    %1244 = vmatpush.msra.mxu0 %v380
    %1245 = vmatmul.f32.gmra.mxu0 %v1228
    %v1246 = vpop.f32.mrf.mxu0
    %v1247 = vadd.f32 0.0, %v1246
    %1248 = vdwg.mxu0
    %1249 = vmatpush.msra.mxu0 %v441
    %1250 = vmatpush.msra.mxu0 %v437
    %1251 = vmatpush.msra.mxu0 %v433
    %1252 = vmatpush.msra.mxu0 %v429
    %1253 = vmatpush.msra.mxu0 %v425
    %1254 = vmatpush.msra.mxu0 %v421
    %1255 = vmatpush.msra.mxu0 %v417
    %1256 = vmatpush.msra.mxu0 %v413
    %1257 = vmatpush.msra.mxu0 %v409
    %1258 = vmatpush.msra.mxu0 %v405
    %1259 = vmatpush.msra.mxu0 %v401
    %1260 = vmatpush.msra.mxu0 %v397
    %1261 = vmatpush.msra.mxu0 %v393
    %1262 = vmatpush.msra.mxu0 %v389
    %1263 = vmatpush.msra.mxu0 %v385
    %1264 = vmatpush.msra.mxu0 %v381
    %1265 = vmatmul.f32.gmra.mxu0 %v1228
    %v1266 = vpop.f32.mrf.mxu0
    %v1267 = vadd.f32 0.0, %v1266
    %1268 = vdwg.mxu0
    %1269 = vmatpush.msra.mxu0 %v442
    %1270 = vmatpush.msra.mxu0 %v438
    %1271 = vmatpush.msra.mxu0 %v434
    %1272 = vmatpush.msra.mxu0 %v430
    %1273 = vmatpush.msra.mxu0 %v426
    %1274 = vmatpush.msra.mxu0 %v422
    %1275 = vmatpush.msra.mxu0 %v418
    %1276 = vmatpush.msra.mxu0 %v414
    %1277 = vmatpush.msra.mxu0 %v410
    %1278 = vmatpush.msra.mxu0 %v406
    %1279 = vmatpush.msra.mxu0 %v402
    %1280 = vmatpush.msra.mxu0 %v398
    %1281 = vmatpush.msra.mxu0 %v394
    %1282 = vmatpush.msra.mxu0 %v390
    %1283 = vmatpush.msra.mxu0 %v386
    %1284 = vmatpush.msra.mxu0 %v382
    %1285 = vmatmul.f32.gmra.mxu0 %v1228
    %v1286 = vpop.f32.mrf.mxu0
    %v1287 = vadd.f32 0.0, %v1286
    %1288 = vdwg.mxu0
    %1289 = vmatpush.msra.mxu0 %v443
    %1290 = vmatpush.msra.mxu0 %v439
    %1291 = vmatpush.msra.mxu0 %v435
    %1292 = vmatpush.msra.mxu0 %v431
    %1293 = vmatpush.msra.mxu0 %v427
    %1294 = vmatpush.msra.mxu0 %v423
    %1295 = vmatpush.msra.mxu0 %v419
    %1296 = vmatpush.msra.mxu0 %v415
    %1297 = vmatpush.msra.mxu0 %v411
    %1298 = vmatpush.msra.mxu0 %v407
    %1299 = vmatpush.msra.mxu0 %v403
    %1300 = vmatpush.msra.mxu0 %v399
    %1301 = vmatpush.msra.mxu0 %v395
    %1302 = vmatpush.msra.mxu0 %v391
    %1303 = vmatpush.msra.mxu0 %v387
    %1304 = vmatpush.msra.mxu0 %v383
    %1305 = vmatmul.f32.gmra.mxu0 %v1228
    %v1306 = vpop.f32.mrf.mxu0
    %v1307 = vadd.f32 0.0, %v1306
    %1308 = vdwg.mxu0
    %v1309 = vadd.f32 %v1224, %v1247
    %v1310 = vadd.f32 %v1225, %v1267
    %v1311 = vadd.f32 %v1226, %v1287
    %v1312 = vadd.f32 %v1227, %v1307
    %v1313 = vxor.u32 %v1309, 2147483648
    %v1314 = vmul.f32 %v1313, 1.442695
    %v1315 = vpow.pop %v1314
    %v1316 = vadd.f32 %v1315, 1.0
    %v1317 = vrcp.pop %v1316
    %v1318 = vmul.f32 %v1316, %v1317
    %v1319 = vsub.f32 1.0, %v1318
    %v1320 = vmul.f32 %v1317, %v1319
    %v1321 = vadd.f32 %v1317, %v1320
    %vm1322 = vweird.f32 %v1316
    %vm1323 = vweird.f32 %v1317
    %vm1324 = vmor %vm1322, %vm1323
    %v1325 = vsel %vm1324, %v1317, %v1321
    %v1326 = vand.u32 2147483647, %v1316
    %vm1327 = vcmp.eq.f32.partialorder %v1326, 8.507059e+37
    %v1328 = vand.u32 %v1316, 2147483648
    %v1329 = vor.u32 1.1754944e-38, %v1328
    %v1330 = vsel %vm1327, %v1329, %v1325
    %v1331 = vmul.f32 1.0, %v1330
    %v1332 = vxor.u32 %v1310, 2147483648
    %v1333 = vmul.f32 %v1332, 1.442695
    %v1334 = vpow.pop %v1333
    %v1335 = vadd.f32 %v1334, 1.0
    %v1336 = vrcp.pop %v1335
    %v1337 = vmul.f32 %v1335, %v1336
    %v1338 = vsub.f32 1.0, %v1337
    %v1339 = vmul.f32 %v1336, %v1338
    %v1340 = vadd.f32 %v1336, %v1339
    %vm1341 = vweird.f32 %v1335
    %vm1342 = vweird.f32 %v1336
    %vm1343 = vmor %vm1341, %vm1342
    %v1344 = vsel %vm1343, %v1336, %v1340
    %v1345 = vand.u32 2147483647, %v1335
    %vm1346 = vcmp.eq.f32.partialorder %v1345, 8.507059e+37
    %v1347 = vand.u32 %v1335, 2147483648
    %v1348 = vor.u32 1.1754944e-38, %v1347
    %v1349 = vsel %vm1346, %v1348, %v1344
    %v1350 = vmul.f32 1.0, %v1349
    %v1351 = vtanh.pop %v1311
    %v1352 = vxor.u32 %v1312, 2147483648
    %v1353 = vmul.f32 %v1352, 1.442695
    %v1354 = vpow.pop %v1353
    %v1355 = vadd.f32 %v1354, 1.0
    %v1356 = vrcp.pop %v1355
    %v1357 = vmul.f32 %v1355, %v1356
    %v1358 = vsub.f32 1.0, %v1357
    %v1359 = vmul.f32 %v1356, %v1358
    %v1360 = vadd.f32 %v1356, %v1359
    %vm1361 = vweird.f32 %v1355
    %vm1362 = vweird.f32 %v1356
    %vm1363 = vmor %vm1361, %vm1362
    %v1364 = vsel %vm1363, %v1356, %v1360
    %v1365 = vand.u32 2147483647, %v1355
    %vm1366 = vcmp.eq.f32.partialorder %v1365, 8.507059e+37
    %v1367 = vand.u32 %v1355, 2147483648
    %v1368 = vor.u32 1.1754944e-38, %v1367
    %v1369 = vsel %vm1366, %v1368, %v1364
    %v1370 = vmul.f32 1.0, %v1369
    %v1371 = vld [vmem:[#allocation4] sm:$0xff]
    %v1372 = vmul.f32 %v1350, %v1371
    %v1373 = vmul.f32 %v1331, %v1351
    %v1374 = vadd.f32 %v1372, %v1373
    %v1375 = vtanh.pop %v1374
    %v1376 = vmul.f32 %v1370, %v1375
    %1377 = vst [vmem:[#allocation4] sm:$0xff] %v1374
    %1378 = vst [vmem:[#allocation3] sm:$0xff] %v1376
    %s1379 = scalar_lea.vmem [#allocation2], 192
    %v1380 = vld [vmem:[%s1379] sm:$0xff]
    %v1381 = vld [vmem:[%s1379 + $0x8] sm:$0xff]
    %v1382 = vld [vmem:[%s1379 + $0x10] sm:$0xff]
    %v1383 = vld [vmem:[%s1379 + $0x18] sm:$0xff]
    %v1384 = vld [vmem:[#allocation3] sm:$0xff]
    %1385 = vmatpush.msra.mxu0 %v440
    %1386 = vmatpush.msra.mxu0 %v436
    %1387 = vmatpush.msra.mxu0 %v432
    %1388 = vmatpush.msra.mxu0 %v428
    %1389 = vmatpush.msra.mxu0 %v424
    %1390 = vmatpush.msra.mxu0 %v420
    %1391 = vmatpush.msra.mxu0 %v416
    %1392 = vmatpush.msra.mxu0 %v412
    %1393 = vmatpush.msra.mxu0 %v408
    %1394 = vmatpush.msra.mxu0 %v404
    %1395 = vmatpush.msra.mxu0 %v400
    %1396 = vmatpush.msra.mxu0 %v396
    %1397 = vmatpush.msra.mxu0 %v392
    %1398 = vmatpush.msra.mxu0 %v388
    %1399 = vmatpush.msra.mxu0 %v384
    %1400 = vmatpush.msra.mxu0 %v380
    %1401 = vmatmul.f32.gmra.mxu0 %v1384
    %v1402 = vpop.f32.mrf.mxu0
    %v1403 = vadd.f32 0.0, %v1402
    %1404 = vdwg.mxu0
    %1405 = vmatpush.msra.mxu0 %v441
    %1406 = vmatpush.msra.mxu0 %v437
    %1407 = vmatpush.msra.mxu0 %v433
    %1408 = vmatpush.msra.mxu0 %v429
    %1409 = vmatpush.msra.mxu0 %v425
    %1410 = vmatpush.msra.mxu0 %v421
    %1411 = vmatpush.msra.mxu0 %v417
    %1412 = vmatpush.msra.mxu0 %v413
    %1413 = vmatpush.msra.mxu0 %v409
    %1414 = vmatpush.msra.mxu0 %v405
    %1415 = vmatpush.msra.mxu0 %v401
    %1416 = vmatpush.msra.mxu0 %v397
    %1417 = vmatpush.msra.mxu0 %v393
    %1418 = vmatpush.msra.mxu0 %v389
    %1419 = vmatpush.msra.mxu0 %v385
    %1420 = vmatpush.msra.mxu0 %v381
    %1421 = vmatmul.f32.gmra.mxu0 %v1384
    %v1422 = vpop.f32.mrf.mxu0
    %v1423 = vadd.f32 0.0, %v1422
    %1424 = vdwg.mxu0
    %1425 = vmatpush.msra.mxu0 %v442
    %1426 = vmatpush.msra.mxu0 %v438
    %1427 = vmatpush.msra.mxu0 %v434
    %1428 = vmatpush.msra.mxu0 %v430
    %1429 = vmatpush.msra.mxu0 %v426
    %1430 = vmatpush.msra.mxu0 %v422
    %1431 = vmatpush.msra.mxu0 %v418
    %1432 = vmatpush.msra.mxu0 %v414
    %1433 = vmatpush.msra.mxu0 %v410
    %1434 = vmatpush.msra.mxu0 %v406
    %1435 = vmatpush.msra.mxu0 %v402
    %1436 = vmatpush.msra.mxu0 %v398
    %1437 = vmatpush.msra.mxu0 %v394
    %1438 = vmatpush.msra.mxu0 %v390
    %1439 = vmatpush.msra.mxu0 %v386
    %1440 = vmatpush.msra.mxu0 %v382
    %1441 = vmatmul.f32.gmra.mxu0 %v1384
    %v1442 = vpop.f32.mrf.mxu0
    %v1443 = vadd.f32 0.0, %v1442
    %1444 = vdwg.mxu0
    %1445 = vmatpush.msra.mxu0 %v443
    %1446 = vmatpush.msra.mxu0 %v439
    %1447 = vmatpush.msra.mxu0 %v435
    %1448 = vmatpush.msra.mxu0 %v431
    %1449 = vmatpush.msra.mxu0 %v427
    %1450 = vmatpush.msra.mxu0 %v423
    %1451 = vmatpush.msra.mxu0 %v419
    %1452 = vmatpush.msra.mxu0 %v415
    %1453 = vmatpush.msra.mxu0 %v411
    %1454 = vmatpush.msra.mxu0 %v407
    %1455 = vmatpush.msra.mxu0 %v403
    %1456 = vmatpush.msra.mxu0 %v399
    %1457 = vmatpush.msra.mxu0 %v395
    %1458 = vmatpush.msra.mxu0 %v391
    %1459 = vmatpush.msra.mxu0 %v387
    %1460 = vmatpush.msra.mxu0 %v383
    %1461 = vmatmul.f32.gmra.mxu0 %v1384
    %v1462 = vpop.f32.mrf.mxu0
    %v1463 = vadd.f32 0.0, %v1462
    %1464 = vdwg.mxu0
    %v1465 = vadd.f32 %v1380, %v1403
    %v1466 = vadd.f32 %v1381, %v1423
    %v1467 = vadd.f32 %v1382, %v1443
    %v1468 = vadd.f32 %v1383, %v1463
    %v1469 = vxor.u32 %v1465, 2147483648
    %v1470 = vmul.f32 %v1469, 1.442695
    %v1471 = vpow.pop %v1470
    %v1472 = vadd.f32 %v1471, 1.0
    %v1473 = vrcp.pop %v1472
    %v1474 = vmul.f32 %v1472, %v1473
    %v1475 = vsub.f32 1.0, %v1474
    %v1476 = vmul.f32 %v1473, %v1475
    %v1477 = vadd.f32 %v1473, %v1476
    %vm1478 = vweird.f32 %v1472
    %vm1479 = vweird.f32 %v1473
    %vm1480 = vmor %vm1478, %vm1479
    %v1481 = vsel %vm1480, %v1473, %v1477
    %v1482 = vand.u32 2147483647, %v1472
    %vm1483 = vcmp.eq.f32.partialorder %v1482, 8.507059e+37
    %v1484 = vand.u32 %v1472, 2147483648
    %v1485 = vor.u32 1.1754944e-38, %v1484
    %v1486 = vsel %vm1483, %v1485, %v1481
    %v1487 = vmul.f32 1.0, %v1486
    %v1488 = vxor.u32 %v1466, 2147483648
    %v1489 = vmul.f32 %v1488, 1.442695
    %v1490 = vpow.pop %v1489
    %v1491 = vadd.f32 %v1490, 1.0
    %v1492 = vrcp.pop %v1491
    %v1493 = vmul.f32 %v1491, %v1492
    %v1494 = vsub.f32 1.0, %v1493
    %v1495 = vmul.f32 %v1492, %v1494
    %v1496 = vadd.f32 %v1492, %v1495
    %vm1497 = vweird.f32 %v1491
    %vm1498 = vweird.f32 %v1492
    %vm1499 = vmor %vm1497, %vm1498
    %v1500 = vsel %vm1499, %v1492, %v1496
    %v1501 = vand.u32 2147483647, %v1491
    %vm1502 = vcmp.eq.f32.partialorder %v1501, 8.507059e+37
    %v1503 = vand.u32 %v1491, 2147483648
    %v1504 = vor.u32 1.1754944e-38, %v1503
    %v1505 = vsel %vm1502, %v1504, %v1500
    %v1506 = vmul.f32 1.0, %v1505
    %v1507 = vtanh.pop %v1467
    %v1508 = vxor.u32 %v1468, 2147483648
    %v1509 = vmul.f32 %v1508, 1.442695
    %v1510 = vpow.pop %v1509
    %v1511 = vadd.f32 %v1510, 1.0
    %v1512 = vrcp.pop %v1511
    %v1513 = vmul.f32 %v1511, %v1512
    %v1514 = vsub.f32 1.0, %v1513
    %v1515 = vmul.f32 %v1512, %v1514
    %v1516 = vadd.f32 %v1512, %v1515
    %vm1517 = vweird.f32 %v1511
    %vm1518 = vweird.f32 %v1512
    %vm1519 = vmor %vm1517, %vm1518
    %v1520 = vsel %vm1519, %v1512, %v1516
    %v1521 = vand.u32 2147483647, %v1511
    %vm1522 = vcmp.eq.f32.partialorder %v1521, 8.507059e+37
    %v1523 = vand.u32 %v1511, 2147483648
    %v1524 = vor.u32 1.1754944e-38, %v1523
    %v1525 = vsel %vm1522, %v1524, %v1520
    %v1526 = vmul.f32 1.0, %v1525
    %v1527 = vld [vmem:[#allocation4] sm:$0xff]
    %v1528 = vmul.f32 %v1506, %v1527
    %v1529 = vmul.f32 %v1487, %v1507
    %v1530 = vadd.f32 %v1528, %v1529
    %v1531 = vtanh.pop %v1530
    %v1532 = vmul.f32 %v1526, %v1531
    %1533 = vst [vmem:[#allocation4] sm:$0xff] %v1530
    %1534 = vst [vmem:[#allocation3] sm:$0xff] %v1532
    %s1535 = scalar_lea.vmem [#allocation2], 224
    %v1536 = vld [vmem:[%s1535] sm:$0xff]
    %v1537 = vld [vmem:[%s1535 + $0x8] sm:$0xff]
    %v1538 = vld [vmem:[%s1535 + $0x10] sm:$0xff]
    %v1539 = vld [vmem:[%s1535 + $0x18] sm:$0xff]
    %v1540 = vld [vmem:[#allocation3] sm:$0xff]
    %1541 = vmatpush.msra.mxu0 %v440
    %1542 = vmatpush.msra.mxu0 %v436
    %1543 = vmatpush.msra.mxu0 %v432
    %1544 = vmatpush.msra.mxu0 %v428
    %1545 = vmatpush.msra.mxu0 %v424
    %1546 = vmatpush.msra.mxu0 %v420
    %1547 = vmatpush.msra.mxu0 %v416
    %1548 = vmatpush.msra.mxu0 %v412
    %1549 = vmatpush.msra.mxu0 %v408
    %1550 = vmatpush.msra.mxu0 %v404
    %1551 = vmatpush.msra.mxu0 %v400
    %1552 = vmatpush.msra.mxu0 %v396
    %1553 = vmatpush.msra.mxu0 %v392
    %1554 = vmatpush.msra.mxu0 %v388
    %1555 = vmatpush.msra.mxu0 %v384
    %1556 = vmatpush.msra.mxu0 %v380
    %1557 = vmatmul.f32.gmra.mxu0 %v1540
    %v1558 = vpop.f32.mrf.mxu0
    %v1559 = vadd.f32 0.0, %v1558
    %1560 = vdwg.mxu0
    %1561 = vmatpush.msra.mxu0 %v441
    %1562 = vmatpush.msra.mxu0 %v437
    %1563 = vmatpush.msra.mxu0 %v433
    %1564 = vmatpush.msra.mxu0 %v429
    %1565 = vmatpush.msra.mxu0 %v425
    %1566 = vmatpush.msra.mxu0 %v421
    %1567 = vmatpush.msra.mxu0 %v417
    %1568 = vmatpush.msra.mxu0 %v413
    %1569 = vmatpush.msra.mxu0 %v409
    %1570 = vmatpush.msra.mxu0 %v405
    %1571 = vmatpush.msra.mxu0 %v401
    %1572 = vmatpush.msra.mxu0 %v397
    %1573 = vmatpush.msra.mxu0 %v393
    %1574 = vmatpush.msra.mxu0 %v389
    %1575 = vmatpush.msra.mxu0 %v385
    %1576 = vmatpush.msra.mxu0 %v381
    %1577 = vmatmul.f32.gmra.mxu0 %v1540
    %v1578 = vpop.f32.mrf.mxu0
    %v1579 = vadd.f32 0.0, %v1578
    %1580 = vdwg.mxu0
    %1581 = vmatpush.msra.mxu0 %v442
    %1582 = vmatpush.msra.mxu0 %v438
    %1583 = vmatpush.msra.mxu0 %v434
    %1584 = vmatpush.msra.mxu0 %v430
    %1585 = vmatpush.msra.mxu0 %v426
    %1586 = vmatpush.msra.mxu0 %v422
    %1587 = vmatpush.msra.mxu0 %v418
    %1588 = vmatpush.msra.mxu0 %v414
    %1589 = vmatpush.msra.mxu0 %v410
    %1590 = vmatpush.msra.mxu0 %v406
    %1591 = vmatpush.msra.mxu0 %v402
    %1592 = vmatpush.msra.mxu0 %v398
    %1593 = vmatpush.msra.mxu0 %v394
    %1594 = vmatpush.msra.mxu0 %v390
    %1595 = vmatpush.msra.mxu0 %v386
    %1596 = vmatpush.msra.mxu0 %v382
    %1597 = vmatmul.f32.gmra.mxu0 %v1540
    %v1598 = vpop.f32.mrf.mxu0
    %v1599 = vadd.f32 0.0, %v1598
    %1600 = vdwg.mxu0
    %1601 = vmatpush.msra.mxu0 %v443
    %1602 = vmatpush.msra.mxu0 %v439
    %1603 = vmatpush.msra.mxu0 %v435
    %1604 = vmatpush.msra.mxu0 %v431
    %1605 = vmatpush.msra.mxu0 %v427
    %1606 = vmatpush.msra.mxu0 %v423
    %1607 = vmatpush.msra.mxu0 %v419
    %1608 = vmatpush.msra.mxu0 %v415
    %1609 = vmatpush.msra.mxu0 %v411
    %1610 = vmatpush.msra.mxu0 %v407
    %1611 = vmatpush.msra.mxu0 %v403
    %1612 = vmatpush.msra.mxu0 %v399
    %1613 = vmatpush.msra.mxu0 %v395
    %1614 = vmatpush.msra.mxu0 %v391
    %1615 = vmatpush.msra.mxu0 %v387
    %1616 = vmatpush.msra.mxu0 %v383
    %1617 = vmatmul.f32.gmra.mxu0 %v1540
    %v1618 = vpop.f32.mrf.mxu0
    %v1619 = vadd.f32 0.0, %v1618
    %1620 = vdwg.mxu0
    %v1621 = vadd.f32 %v1536, %v1559
    %v1622 = vadd.f32 %v1537, %v1579
    %v1623 = vadd.f32 %v1538, %v1599
    %v1624 = vadd.f32 %v1539, %v1619
    %v1625 = vxor.u32 %v1621, 2147483648
    %v1626 = vmul.f32 %v1625, 1.442695
    %v1627 = vpow.pop %v1626
    %v1628 = vadd.f32 %v1627, 1.0
    %v1629 = vrcp.pop %v1628
    %v1630 = vmul.f32 %v1628, %v1629
    %v1631 = vsub.f32 1.0, %v1630
    %v1632 = vmul.f32 %v1629, %v1631
    %v1633 = vadd.f32 %v1629, %v1632
    %vm1634 = vweird.f32 %v1628
    %vm1635 = vweird.f32 %v1629
    %vm1636 = vmor %vm1634, %vm1635
    %v1637 = vsel %vm1636, %v1629, %v1633
    %v1638 = vand.u32 2147483647, %v1628
    %vm1639 = vcmp.eq.f32.partialorder %v1638, 8.507059e+37
    %v1640 = vand.u32 %v1628, 2147483648
    %v1641 = vor.u32 1.1754944e-38, %v1640
    %v1642 = vsel %vm1639, %v1641, %v1637
    %v1643 = vmul.f32 1.0, %v1642
    %v1644 = vxor.u32 %v1622, 2147483648
    %v1645 = vmul.f32 %v1644, 1.442695
    %v1646 = vpow.pop %v1645
    %v1647 = vadd.f32 %v1646, 1.0
    %v1648 = vrcp.pop %v1647
    %v1649 = vmul.f32 %v1647, %v1648
    %v1650 = vsub.f32 1.0, %v1649
    %v1651 = vmul.f32 %v1648, %v1650
    %v1652 = vadd.f32 %v1648, %v1651
    %vm1653 = vweird.f32 %v1647
    %vm1654 = vweird.f32 %v1648
    %vm1655 = vmor %vm1653, %vm1654
    %v1656 = vsel %vm1655, %v1648, %v1652
    %v1657 = vand.u32 2147483647, %v1647
    %vm1658 = vcmp.eq.f32.partialorder %v1657, 8.507059e+37
    %v1659 = vand.u32 %v1647, 2147483648
    %v1660 = vor.u32 1.1754944e-38, %v1659
    %v1661 = vsel %vm1658, %v1660, %v1656
    %v1662 = vmul.f32 1.0, %v1661
    %v1663 = vtanh.pop %v1623
    %v1664 = vxor.u32 %v1624, 2147483648
    %v1665 = vmul.f32 %v1664, 1.442695
    %v1666 = vpow.pop %v1665
    %v1667 = vadd.f32 %v1666, 1.0
    %v1668 = vrcp.pop %v1667
    %v1669 = vmul.f32 %v1667, %v1668
    %v1670 = vsub.f32 1.0, %v1669
    %v1671 = vmul.f32 %v1668, %v1670
    %v1672 = vadd.f32 %v1668, %v1671
    %vm1673 = vweird.f32 %v1667
    %vm1674 = vweird.f32 %v1668
    %vm1675 = vmor %vm1673, %vm1674
    %v1676 = vsel %vm1675, %v1668, %v1672
    %v1677 = vand.u32 2147483647, %v1667
    %vm1678 = vcmp.eq.f32.partialorder %v1677, 8.507059e+37
    %v1679 = vand.u32 %v1667, 2147483648
    %v1680 = vor.u32 1.1754944e-38, %v1679
    %v1681 = vsel %vm1678, %v1680, %v1676
    %v1682 = vmul.f32 1.0, %v1681
    %v1683 = vld [vmem:[#allocation4] sm:$0xff]
    %v1684 = vmul.f32 %v1662, %v1683
    %v1685 = vmul.f32 %v1643, %v1663
    %v1686 = vadd.f32 %v1684, %v1685
    %v1687 = vtanh.pop %v1686
    %v1688 = vmul.f32 %v1682, %v1687
    %1689 = vst [vmem:[#allocation4] sm:$0xff] %v1686
    %1690 = vst [vmem:[#allocation3] sm:$0xff] %v1688
    %v1691 = vld [vmem:[#allocation3] sm:$0xff]
    %v1692 = vld [vmem:[#allocation13] sm:$0xff]
    %v1693 = vld [vmem:[#allocation13 + $0x8] sm:$0xff]
    %v1694 = vld [vmem:[#allocation13 + $0x10] sm:$0xff]
    %v1695 = vld [vmem:[#allocation13 + $0x18] sm:$0xff]
    %v1696 = vld [vmem:[#allocation13 + $0x20] sm:$0xff]
    %v1697 = vld [vmem:[#allocation13 + $0x28] sm:$0xff]
    %v1698 = vld [vmem:[#allocation13 + $0x30] sm:$0xff]
    %v1699 = vld [vmem:[#allocation13 + $0x38] sm:$0xff]
    %v1700 = vld [vmem:[#allocation13 + $0x40] sm:$0xff]
    %v1701 = vld [vmem:[#allocation13 + $0x48] sm:$0xff]
    %v1702 = vld [vmem:[#allocation13 + $0x50] sm:$0xff]
    %v1703 = vld [vmem:[#allocation13 + $0x58] sm:$0xff]
    %v1704 = vld [vmem:[#allocation13 + $0x60] sm:$0xff]
    %v1705 = vld [vmem:[#allocation13 + $0x68] sm:$0xff]
    %v1706 = vld [vmem:[#allocation13 + $0x70] sm:$0xff]
    %v1707 = vld [vmem:[#allocation13 + $0x78] sm:$0xff]
    %v1708 = vld [vmem:[%s5] sm:$0x1]
    %v1710 = vperm.slane %v1708, 0
    %1712 = vmatpush.msra.mxu0 %v1707
    %1713 = vmatpush.msra.mxu0 %v1706
    %1714 = vmatpush.msra.mxu0 %v1705
    %1715 = vmatpush.msra.mxu0 %v1704
    %1716 = vmatpush.msra.mxu0 %v1703
    %1717 = vmatpush.msra.mxu0 %v1702
    %1718 = vmatpush.msra.mxu0 %v1701
    %1719 = vmatpush.msra.mxu0 %v1700
    %1720 = vmatpush.msra.mxu0 %v1699
    %1721 = vmatpush.msra.mxu0 %v1698
    %1722 = vmatpush.msra.mxu0 %v1697
    %1723 = vmatpush.msra.mxu0 %v1696
    %1724 = vmatpush.msra.mxu0 %v1695
    %1725 = vmatpush.msra.mxu0 %v1694
    %1726 = vmatpush.msra.mxu0 %v1693
    %1727 = vmatpush.msra.mxu0 %v1692
    %1728 = vmatmul.f32.gmra.mxu0 %v1691
    %v1729 = vpop.f32.mrf.mxu0
    %v1730 = vadd.f32 %v1710, %v1729
    %1731 = vdwg.mxu0
    %1732 = vst [vmem:[#allocation14] sm:$0xff] %v1730
    // Predicated region
    $region46: #{tpu_custom_call.1} parent=1 // pred_check
      _
    $region47: #{tpu_custom_call.1} parent=1 // pred_check_branch
      %1734 = sbr.rel (0) target = $region49
    $region48: #{tpu_custom_call.1} parent=1 // pred_region
      %1736 = vsyncadd [#allocation7], 0
      %s1738 = sshll.u32 [#allocation14], 4
      %s1739 = int_to_ptr.vmem [resolvable:$true] %s1738
      %s1740 = sshll.u32 %s6, 4
      %s1741 = int_to_ptr.hbm [resolvable:$true] %s1740
      %1743 = dma.vmem_to_hbm [thread:$0]  %s1739, 128, %s1741, [#allocation7]
    $region49: #{tpu_custom_call.1} parent=1 // pred_fallthru
      _
    // Predicated region
    $region50: #{tpu_custom_call.1} parent=1 // pred_check
      _
    $region51: #{tpu_custom_call.1} parent=1 // pred_check_branch
      %1745 = sbr.rel (0) target = $region53
    $region52: #{tpu_custom_call.1} parent=1 // pred_region
      %1747 = dma.done [#allocation7], 128
    $region53: #{tpu_custom_call.1} parent=1 // pred_fallthru
      _
    %1748 = vsyncpa [#allocation6], 1
    %1749 = vsyncpa [#allocation9], 1
    %1750 = vsyncpa [#allocation12], 1
    %1751 = vsyncpa [#allocation7], 1

</llo_original>
